<compile_context>
chip_gen: v6e
topology: v6e:2x2x1
jax: 0.10.0
libtpu: 0.0.40
codegen_flags: <defaults>
</compile_context>

<pallas_src>
import functools

import jax
import jax.numpy as jnp
from jax.experimental import pallas as pl
from jax.experimental.pallas import tpu as pltpu

LANE = 128
SUBLANE = 8


def _round_up(n, m):
    return ((n + m - 1) // m) * m


def mlp6_kernel(x_ref, w1_ref, ws_ref, bs_ref, o_ref):
    """Fused 6-layer MLP: ReLU(x@W+b) x5, then x@W+b.

    x_ref : [bt, F]     compute dtype, F unpadded
    w1_ref: [F, W]      compute dtype, layer-1 weight (out dim padded to W)
    ws_ref: [5, W, W]   compute dtype, layers 2..6 stacked (zero-padded)
    bs_ref: [6, 1, W]   f32 biases, stacked (zero-padded)
    o_ref : [bt, W]     f32, lane-dense store (real columns sliced by wrapper)
    """
    # Layer 1: unpadded K, MXU accumulate in f32, bias-add + ReLU in f32 on the VPU.
    h = jnp.dot(x_ref[...], w1_ref[...], preferred_element_type=jnp.float32)
    h = jnp.maximum(h + bs_ref[0], 0.0)

    # Layers 2..6: static unroll, static indices into the stacked resident weights.
    for li in range(5):
        h = jnp.dot(h.astype(ws_ref.dtype), ws_ref[li],
                    preferred_element_type=jnp.float32) + bs_ref[li + 1]
        if li < 4:  # no ReLU on the final layer
            h = jnp.maximum(h, 0.0)

    o_ref[...] = h.astype(o_ref.dtype)


def prepare_params(params, compute_dtype=jnp.bfloat16):
    """Pad/cast/stack the 6 (w, b) pairs ONCE at init time (hoisted off the hot path).

    Zero-padding is exact: padded hidden units get 0 pre-activation -> ReLU(0) = 0 ->
    contribute nothing downstream; padded output columns are sliced off by the wrapper.
    """
    assert len(params) == 6
    dims = tuple([params[0][0].shape[0]] + [w.shape[1] for w, _ in params])
    F = dims[0]
    W = _round_up(max(dims[1:]), LANE)  # common lane-aligned width for hidden/out dims

    w1 = jnp.zeros((F, W), compute_dtype)
    w1 = w1.at[:, :dims[1]].set(params[0][0].astype(compute_dtype))

    ws = jnp.zeros((5, W, W), compute_dtype)
    for li in range(1, 6):
        w, _ = params[li]
        ws = ws.at[li - 1, :dims[li], :dims[li + 1]].set(w.astype(compute_dtype))

    bs = jnp.zeros((6, 1, W), jnp.float32)
    for li in range(6):
        b = params[li][1].reshape(-1)
        bs = bs.at[li, 0, :dims[li + 1]].set(b.astype(jnp.float32))

    return w1, ws, bs, dims


def batch_net_5_2_forward(x, w1, ws, bs, *, dims, batch_tile=256):
    """Forward pass. Only x is cast/padded per call; params are already prepared."""
    B, F = x.shape
    assert F == dims[0]
    O = dims[-1]
    W = ws.shape[-1]
    compute_dtype = w1.dtype

    # Batch tile: multiple of 8 sublanes; keep >= 2 "parallel" grid steps when the
    # batch allows so both v7x TensorCores get work (free on v5e/v6e).
    bt = max(SUBLANE, min(batch_tile, _round_up(B, SUBLANE)))
    bt = _round_up(bt, SUBLANE)
    B_pad = _round_up(B, bt)
    if B_pad // bt < 2 and B_pad > SUBLANE:
        bt = _round_up(pl.cdiv(B_pad, 2), SUBLANE)
        B_pad = _round_up(B, bt)
    grid = (B_pad // bt,)

    # Feature dim stays unpadded (full-array block exception); only pad batch rows.
    xp = x.astype(compute_dtype)
    if B_pad != B:
        xp = jnp.zeros((B_pad, F), compute_dtype).at[:B].set(xp)

    in_specs = [
        pl.BlockSpec((bt, F), lambda i: (i, 0)),        # per-step batch tile of x
        pl.BlockSpec((F, W), lambda i: (0, 0)),         # layer-1 weight, VMEM-resident
        pl.BlockSpec((5, W, W), lambda i: (0, 0, 0)),   # stacked weights, resident
        pl.BlockSpec((6, 1, W), lambda i: (0, 0, 0)),   # stacked biases, resident
    ]
    out_spec = pl.BlockSpec((bt, W), lambda i: (i, 0))  # lane-dense output store

    # Real (unpadded) cost so XLA schedules around the custom call sensibly.
    real_mac = sum(a * b for a, b in zip(dims[:-1], dims[1:]))
    flops = 2 * B * real_mac
    bytes_accessed = (B * F * xp.dtype.itemsize + B * O * 4
                      + real_mac * w1.dtype.itemsize + sum(dims[1:]) * 4)

    out = pl.pallas_call(
        mlp6_kernel,
        out_shape=jax.ShapeDtypeStruct((B_pad, W), jnp.float32),
        grid_spec=pltpu.PrefetchScalarGridSpec(
            num_scalar_prefetch=0,
            grid=grid,
            in_specs=in_specs,
            out_specs=out_spec,
        ),
        compiler_params=pltpu.CompilerParams(
            dimension_semantics=("parallel",)),
        cost_estimate=pl.CostEstimate(
            flops=flops, transcendentals=0, bytes_accessed=bytes_accessed),
    )(xp, w1, ws, bs)

    return out[:B, :O]


def reference_forward(x, params):
    h = x
    for li, (w, b) in enumerate(params):
        h = h @ w + b.reshape(1, -1)
        if li < len(params) - 1:
            h = jnp.maximum(h, 0.0)
    return h


if __name__ == "__main__":
    # Batch_Net_5_2(in_dim, n_h1, n_h2, n_h3, n_h4, n_h5, out_dim)
    layer_dims = [32, 64, 48, 48, 32, 32, 10]
    batch = 512

    key = jax.random.PRNGKey(0)
    keys = jax.random.split(key, 1 + 2 * 6)

    # PyTorch-style uniform(-1/sqrt(fan_in), 1/sqrt(fan_in)) init, stored [in, out].
    params = []
    for li in range(6):
        fan_in, fan_out = layer_dims[li], layer_dims[li + 1]
        lim = 1.0 / float(fan_in) ** 0.5
        w = jax.random.uniform(keys[1 + 2 * li], (fan_in, fan_out),
                               jnp.float32, -lim, lim)
        b = jax.random.uniform(keys[2 + 2 * li], (fan_out,),
                               jnp.float32, -lim, lim)
        params.append((w, b))

    x = jax.random.normal(keys[0], (batch, layer_dims[0]), jnp.float32)
    ref = reference_forward(x, params)

    # Default bf16 MXU-operand path (params prepared once, forward jitted).
    w1, ws, bs, dims = prepare_params(params, compute_dtype=jnp.bfloat16)
    fwd = jax.jit(functools.partial(batch_net_5_2_forward, dims=dims, batch_tile=256))
    out_bf16 = jax.block_until_ready(fwd(x, w1, ws, bs))
    assert out_bf16.shape == (batch, layer_dims[-1])
    assert jnp.allclose(out_bf16, ref, atol=5e-2, rtol=5e-2), "bf16 path mismatch"

    # f32 path: proves the padding/stacking scheme is exact to tight tolerance.
    w1f, wsf, bsf, _ = prepare_params(params, compute_dtype=jnp.float32)
    out_f32 = jax.block_until_ready(
        batch_net_5_2_forward(x, w1f, wsf, bsf, dims=dims, batch_tile=256))
    assert jnp.allclose(out_f32, ref, atol=1e-4, rtol=1e-4), "f32 path mismatch"

    print("KERNEL_OK")
</pallas_src>

<mosaic_0001>
module attributes {stable_mosaic.version = 11 : i64} {
  func.func @mlp6_kernel(%arg0: i32, %arg1: memref<256x32xbf16, #tpu.memory_space<vmem>>, %arg2: memref<32x128xbf16, #tpu.memory_space<vmem>>, %arg3: memref<5x128x128xbf16, #tpu.memory_space<vmem>>, %arg4: memref<6x1x128xf32, #tpu.memory_space<vmem>>, %arg5: memref<256x128xf32, #tpu.memory_space<vmem>>) attributes {dimension_semantics = [#tpu.dimension_semantics<parallel>], iteration_bounds = array<i64: 2>, scalar_prefetch = 0 : i64, scratch_operands = 0 : i64, tpu.core_type = #tpu.core_type<tc>, window_params = [{transform_indices = @transform_0, window_bounds = array<i64: 256, 32>}, {pipeline_mode = #tpu.pipeline_mode<synchronous>, transform_indices = @transform_1, window_bounds = array<i64: 32, 128>}, {pipeline_mode = #tpu.pipeline_mode<synchronous>, transform_indices = @transform_2, window_bounds = array<i64: 5, 128, 128>}, {pipeline_mode = #tpu.pipeline_mode<synchronous>, transform_indices = @transform_3, window_bounds = array<i64: 6, 1, 128>}, {transform_indices = @transform_4, window_bounds = array<i64: 256, 128>}]} {
    %c0 = arith.constant 0 : index
    %c0_0 = arith.constant 0 : index
    %0 = vector.load %arg1[%c0, %c0_0] : memref<256x32xbf16, #tpu.memory_space<vmem>>, vector<256x32xbf16>
    %c0_1 = arith.constant 0 : index
    %c0_2 = arith.constant 0 : index
    %1 = vector.load %arg2[%c0_1, %c0_2] : memref<32x128xbf16, #tpu.memory_space<vmem>>, vector<32x128xbf16>
    %cst = arith.constant dense<0.000000e+00> : vector<256x128xf32>
    %2 = tpu.matmul %0, %1, %cst {dimension_numbers = #tpu.dot_dimension_numbers<[1], [0], [0], [1], [0, 0, 1, 1], [], []>} : vector<256x32xbf16>, vector<32x128xbf16>, vector<256x128xf32> -> vector<256x128xf32>
    %c0_3 = arith.constant 0 : index
    %c0_4 = arith.constant 0 : index
    %c0_5 = arith.constant 0 : index
    %3 = vector.load %arg4[%c0_3, %c0_4, %c0_5] : memref<6x1x128xf32, #tpu.memory_space<vmem>>, vector<1x1x128xf32>
    %4 = vector.shape_cast %3 : vector<1x1x128xf32> to vector<1x128xf32>
    %5 = vector.broadcast %4 : vector<1x128xf32> to vector<256x128xf32>
    %6 = arith.addf %2, %5 : vector<256x128xf32>
    %cst_6 = arith.constant 0.000000e+00 : f32
    %7 = vector.broadcast %cst_6 : f32 to vector<256x128xf32>
    %8 = arith.maximumf %6, %7 : vector<256x128xf32>
    %9 = arith.truncf %8 : vector<256x128xf32> to vector<256x128xbf16>
    %c0_7 = arith.constant 0 : index
    %c0_8 = arith.constant 0 : index
    %c0_9 = arith.constant 0 : index
    %10 = vector.load %arg3[%c0_7, %c0_8, %c0_9] : memref<5x128x128xbf16, #tpu.memory_space<vmem>>, vector<1x128x128xbf16>
    %11 = vector.shape_cast %10 : vector<1x128x128xbf16> to vector<128x128xbf16>
    %cst_10 = arith.constant dense<0.000000e+00> : vector<256x128xf32>
    %12 = tpu.matmul %9, %11, %cst_10 {dimension_numbers = #tpu.dot_dimension_numbers<[1], [0], [0], [1], [0, 0, 1, 1], [], []>} : vector<256x128xbf16>, vector<128x128xbf16>, vector<256x128xf32> -> vector<256x128xf32>
    %c1 = arith.constant 1 : index
    %c0_11 = arith.constant 0 : index
    %c0_12 = arith.constant 0 : index
    %13 = vector.load %arg4[%c1, %c0_11, %c0_12] : memref<6x1x128xf32, #tpu.memory_space<vmem>>, vector<1x1x128xf32>
    %14 = vector.shape_cast %13 : vector<1x1x128xf32> to vector<1x128xf32>
    %15 = vector.broadcast %14 : vector<1x128xf32> to vector<256x128xf32>
    %16 = arith.addf %12, %15 : vector<256x128xf32>
    %cst_13 = arith.constant 0.000000e+00 : f32
    %17 = vector.broadcast %cst_13 : f32 to vector<256x128xf32>
    %18 = arith.maximumf %16, %17 : vector<256x128xf32>
    %19 = arith.truncf %18 : vector<256x128xf32> to vector<256x128xbf16>
    %c1_14 = arith.constant 1 : index
    %c0_15 = arith.constant 0 : index
    %c0_16 = arith.constant 0 : index
    %20 = vector.load %arg3[%c1_14, %c0_15, %c0_16] : memref<5x128x128xbf16, #tpu.memory_space<vmem>>, vector<1x128x128xbf16>
    %21 = vector.shape_cast %20 : vector<1x128x128xbf16> to vector<128x128xbf16>
    %cst_17 = arith.constant dense<0.000000e+00> : vector<256x128xf32>
    %22 = tpu.matmul %19, %21, %cst_17 {dimension_numbers = #tpu.dot_dimension_numbers<[1], [0], [0], [1], [0, 0, 1, 1], [], []>} : vector<256x128xbf16>, vector<128x128xbf16>, vector<256x128xf32> -> vector<256x128xf32>
    %c2 = arith.constant 2 : index
    %c0_18 = arith.constant 0 : index
    %c0_19 = arith.constant 0 : index
    %23 = vector.load %arg4[%c2, %c0_18, %c0_19] : memref<6x1x128xf32, #tpu.memory_space<vmem>>, vector<1x1x128xf32>
    %24 = vector.shape_cast %23 : vector<1x1x128xf32> to vector<1x128xf32>
    %25 = vector.broadcast %24 : vector<1x128xf32> to vector<256x128xf32>
    %26 = arith.addf %22, %25 : vector<256x128xf32>
    %cst_20 = arith.constant 0.000000e+00 : f32
    %27 = vector.broadcast %cst_20 : f32 to vector<256x128xf32>
    %28 = arith.maximumf %26, %27 : vector<256x128xf32>
    %29 = arith.truncf %28 : vector<256x128xf32> to vector<256x128xbf16>
    %c2_21 = arith.constant 2 : index
    %c0_22 = arith.constant 0 : index
    %c0_23 = arith.constant 0 : index
    %30 = vector.load %arg3[%c2_21, %c0_22, %c0_23] : memref<5x128x128xbf16, #tpu.memory_space<vmem>>, vector<1x128x128xbf16>
    %31 = vector.shape_cast %30 : vector<1x128x128xbf16> to vector<128x128xbf16>
    %cst_24 = arith.constant dense<0.000000e+00> : vector<256x128xf32>
    %32 = tpu.matmul %29, %31, %cst_24 {dimension_numbers = #tpu.dot_dimension_numbers<[1], [0], [0], [1], [0, 0, 1, 1], [], []>} : vector<256x128xbf16>, vector<128x128xbf16>, vector<256x128xf32> -> vector<256x128xf32>
    %c3 = arith.constant 3 : index
    %c0_25 = arith.constant 0 : index
    %c0_26 = arith.constant 0 : index
    %33 = vector.load %arg4[%c3, %c0_25, %c0_26] : memref<6x1x128xf32, #tpu.memory_space<vmem>>, vector<1x1x128xf32>
    %34 = vector.shape_cast %33 : vector<1x1x128xf32> to vector<1x128xf32>
    %35 = vector.broadcast %34 : vector<1x128xf32> to vector<256x128xf32>
    %36 = arith.addf %32, %35 : vector<256x128xf32>
    %cst_27 = arith.constant 0.000000e+00 : f32
    %37 = vector.broadcast %cst_27 : f32 to vector<256x128xf32>
    %38 = arith.maximumf %36, %37 : vector<256x128xf32>
    %39 = arith.truncf %38 : vector<256x128xf32> to vector<256x128xbf16>
    %c3_28 = arith.constant 3 : index
    %c0_29 = arith.constant 0 : index
    %c0_30 = arith.constant 0 : index
    %40 = vector.load %arg3[%c3_28, %c0_29, %c0_30] : memref<5x128x128xbf16, #tpu.memory_space<vmem>>, vector<1x128x128xbf16>
    %41 = vector.shape_cast %40 : vector<1x128x128xbf16> to vector<128x128xbf16>
    %cst_31 = arith.constant dense<0.000000e+00> : vector<256x128xf32>
    %42 = tpu.matmul %39, %41, %cst_31 {dimension_numbers = #tpu.dot_dimension_numbers<[1], [0], [0], [1], [0, 0, 1, 1], [], []>} : vector<256x128xbf16>, vector<128x128xbf16>, vector<256x128xf32> -> vector<256x128xf32>
    %c4 = arith.constant 4 : index
    %c0_32 = arith.constant 0 : index
    %c0_33 = arith.constant 0 : index
    %43 = vector.load %arg4[%c4, %c0_32, %c0_33] : memref<6x1x128xf32, #tpu.memory_space<vmem>>, vector<1x1x128xf32>
    %44 = vector.shape_cast %43 : vector<1x1x128xf32> to vector<1x128xf32>
    %45 = vector.broadcast %44 : vector<1x128xf32> to vector<256x128xf32>
    %46 = arith.addf %42, %45 : vector<256x128xf32>
    %cst_34 = arith.constant 0.000000e+00 : f32
    %47 = vector.broadcast %cst_34 : f32 to vector<256x128xf32>
    %48 = arith.maximumf %46, %47 : vector<256x128xf32>
    %49 = arith.truncf %48 : vector<256x128xf32> to vector<256x128xbf16>
    %c4_35 = arith.constant 4 : index
    %c0_36 = arith.constant 0 : index
    %c0_37 = arith.constant 0 : index
    %50 = vector.load %arg3[%c4_35, %c0_36, %c0_37] : memref<5x128x128xbf16, #tpu.memory_space<vmem>>, vector<1x128x128xbf16>
    %51 = vector.shape_cast %50 : vector<1x128x128xbf16> to vector<128x128xbf16>
    %cst_38 = arith.constant dense<0.000000e+00> : vector<256x128xf32>
    %52 = tpu.matmul %49, %51, %cst_38 {dimension_numbers = #tpu.dot_dimension_numbers<[1], [0], [0], [1], [0, 0, 1, 1], [], []>} : vector<256x128xbf16>, vector<128x128xbf16>, vector<256x128xf32> -> vector<256x128xf32>
    %c5 = arith.constant 5 : index
    %c0_39 = arith.constant 0 : index
    %c0_40 = arith.constant 0 : index
    %53 = vector.load %arg4[%c5, %c0_39, %c0_40] : memref<6x1x128xf32, #tpu.memory_space<vmem>>, vector<1x1x128xf32>
    %54 = vector.shape_cast %53 : vector<1x1x128xf32> to vector<1x128xf32>
    %55 = vector.broadcast %54 : vector<1x128xf32> to vector<256x128xf32>
    %56 = arith.addf %52, %55 : vector<256x128xf32>
    %c0_41 = arith.constant 0 : index
    %c0_42 = arith.constant 0 : index
    %57 = vector.load %arg5[%c0_41, %c0_42] : memref<256x128xf32, #tpu.memory_space<vmem>>, vector<256x128xf32>
    tpu.vector_store %arg5[%c0_41, %c0_42], %56 {strides = array<i32>} : memref<256x128xf32, #tpu.memory_space<vmem>>, vector<256x128xf32>,
    return
  }
  func.func @transform_0(%arg0: i32) -> (i32, i32) {
    %c0_i32 = arith.constant 0 : i32
    %c0_i32_0 = arith.constant 0 : i32
    return %arg0, %c0_i32 : i32, i32
  }
  func.func @transform_1(%arg0: i32) -> (i32, i32) {
    %c0_i32 = arith.constant 0 : i32
    %c0_i32_0 = arith.constant 0 : i32
    %c0_i32_1 = arith.constant 0 : i32
    return %c0_i32, %c0_i32_0 : i32, i32
  }
  func.func @transform_2(%arg0: i32) -> (i32, i32, i32) {
    %c0_i32 = arith.constant 0 : i32
    %c0_i32_0 = arith.constant 0 : i32
    %c0_i32_1 = arith.constant 0 : i32
    %c0_i32_2 = arith.constant 0 : i32
    return %c0_i32, %c0_i32_0, %c0_i32_1 : i32, i32, i32
  }
  func.func @transform_3(%arg0: i32) -> (i32, i32, i32) {
    %c0_i32 = arith.constant 0 : i32
    %c0_i32_0 = arith.constant 0 : i32
    %c0_i32_1 = arith.constant 0 : i32
    %c0_i32_2 = arith.constant 0 : i32
    return %c0_i32, %c0_i32_0, %c0_i32_1 : i32, i32, i32
  }
  func.func @transform_4(%arg0: i32) -> (i32, i32) {
    %c0_i32 = arith.constant 0 : i32
    %c0_i32_0 = arith.constant 0 : i32
    return %arg0, %c0_i32 : i32, i32
  }
}

</mosaic_0001>

<llo_original>
// kernel: batch_net_5_2_forward.1
$region0: #{batch_net_5_2_forward.1}
  #allocation0 [shape = 'u32[]', space=smem, size = 0x4, offset = 0x4, fixed_abs, tag = 'smem constant byte address 0x4 - core index']
  #allocation1 [shape = 'u32[144,128]{1,0:T(1,128)}', space=vmem, size = 0x12000, scoped, tag = 'internal scratch']
  %s0 = inlined_call_operand.vmem [shape: bf16[512,32], index: 0, kind: input, shape index: {}]
  %s1 = inlined_call_operand.vmem [shape: bf16[32,128], index: 1, kind: input, shape index: {}]
  %s2 = inlined_call_operand.vmem [shape: bf16[5,128,128], index: 2, kind: input, shape index: {}]
  %s3 = inlined_call_operand.vmem [shape: f32[6,1,128], index: 3, kind: input, shape index: {}]
  %s4 = inlined_call_operand.vmem [shape: f32[512,128], index: 4, kind: output, shape index: {}]
  %s5 = sld [smem:[#allocation0]]
  $region49: #{batch_net_5_2_forward.1} parent=0
    _
  %s7 = ssub.s32 1, %s5
  %s8 = scalar_select 0, %s7, %s5
  loop: start=0, step=1, limit=4
  $region2: #{batch_net_5_2_forward.1} parent=0 // loop_pre_header
    _
  $region3: #{batch_net_5_2_forward.1} parent=0 // loop_header
    %s10 = sphi 0, %s14
    %p11 = scmp.ge.s32.totalorder %s10, 4
    %s20 = sphi 0, %s22
    %s23 = sphi 0, %s20
    %s24 = sphi 0, %s23
    %s40 = sphi 0, %s24
    %s44 = sphi 0, %s44
    %s46 = sphi 0, %s44
    %s47 = sphi 0, %s46
    %s61 = sphi 0, %s47
    %s65 = sphi 0, %s65
    %s67 = sphi 0, %s65
    %s68 = sphi 0, %s67
    %s82 = sphi 0, %s68
    %s86 = sphi 0, %s86
    %s88 = sphi 0, %s86
    %s89 = sphi 0, %s88
    %s103 = sphi 0, %s89
    %s109 = sphi 0, %s111
    %s112 = sphi 0, %s109
    %s113 = sphi 0, %s112
    %s129 = sphi 0, %s113
  $region4: #{batch_net_5_2_forward.1} parent=0 // loop_header_branch
    %13 = sbr.rel (%p11) target = $region8
  $region5: #{batch_net_5_2_forward.1} parent=0 // loop_body
    %s15 = ssub.s32 %s10, 1
    %s16 = ssub.s32 %s10, 2
    %s17 = sadd.s32 %s10, 1
    %s18 = ssub.s32 %s10, %s17
    %p19 = scmp.eq.s32.totalorder %s18, 0
    %s21 = sadd.s32 %s20, 1
    %s22 = scalar_select %p19, %s20, %s21
    %p25 = pneg %p19
    %p26 = scmp.eq.s32.totalorder %s10, 1
    %p27 = por %p25, %p26
    %p28 = scmp.ne.s32.totalorder %s20, %s23
    %p29 = scmp.eq.s32.totalorder %s10, 0
    %p30 = por %p28, %p29
    %p31 = scmp.ne.s32.totalorder %s20, %s23
    %p32 = scmp.eq.s32.totalorder %s15, 1
    %p33 = por %p31, %p32
    %p34 = scmp.ne.s32.totalorder %s23, %s24
    %p35 = scmp.eq.s32.totalorder %s15, 0
    %p36 = por %p34, %p35
    %p37 = scmp.ne.s32.totalorder %s23, %s24
    %p38 = scmp.eq.s32.totalorder %s16, 1
    %p39 = por %p37, %p38
    %p41 = scmp.ne.s32.totalorder %s24, %s40
    %p42 = scmp.eq.s32.totalorder %s16, 0
    %p43 = por %p41, %p42
    %s45 = sadd.s32 %s44, 1
    %p48 = scmp.eq.s32.totalorder %s10, 1
    %p49 = scmp.ne.s32.totalorder %s44, %s46
    %p50 = scmp.eq.s32.totalorder %s10, 0
    %p51 = por %p49, %p50
    %p52 = scmp.ne.s32.totalorder %s44, %s46
    %p53 = scmp.eq.s32.totalorder %s15, 1
    %p54 = por %p52, %p53
    %p55 = scmp.ne.s32.totalorder %s46, %s47
    %p56 = scmp.eq.s32.totalorder %s15, 0
    %p57 = por %p55, %p56
    %p58 = scmp.ne.s32.totalorder %s46, %s47
    %p59 = scmp.eq.s32.totalorder %s16, 1
    %p60 = por %p58, %p59
    %p62 = scmp.ne.s32.totalorder %s47, %s61
    %p63 = scmp.eq.s32.totalorder %s16, 0
    %p64 = por %p62, %p63
    %s66 = sadd.s32 %s65, 1
    %p69 = scmp.eq.s32.totalorder %s10, 1
    %p70 = scmp.ne.s32.totalorder %s65, %s67
    %p71 = scmp.eq.s32.totalorder %s10, 0
    %p72 = por %p70, %p71
    %p73 = scmp.ne.s32.totalorder %s65, %s67
    %p74 = scmp.eq.s32.totalorder %s15, 1
    %p75 = por %p73, %p74
    %p76 = scmp.ne.s32.totalorder %s67, %s68
    %p77 = scmp.eq.s32.totalorder %s15, 0
    %p78 = por %p76, %p77
    %p79 = scmp.ne.s32.totalorder %s67, %s68
    %p80 = scmp.eq.s32.totalorder %s16, 1
    %p81 = por %p79, %p80
    %p83 = scmp.ne.s32.totalorder %s68, %s82
    %p84 = scmp.eq.s32.totalorder %s16, 0
    %p85 = por %p83, %p84
    %s87 = sadd.s32 %s86, 1
    %p90 = scmp.eq.s32.totalorder %s10, 1
    %p91 = scmp.ne.s32.totalorder %s86, %s88
    %p92 = scmp.eq.s32.totalorder %s10, 0
    %p93 = por %p91, %p92
    %p94 = scmp.ne.s32.totalorder %s86, %s88
    %p95 = scmp.eq.s32.totalorder %s15, 1
    %p96 = por %p94, %p95
    %p97 = scmp.ne.s32.totalorder %s88, %s89
    %p98 = scmp.eq.s32.totalorder %s15, 0
    %p99 = por %p97, %p98
    %p100 = scmp.ne.s32.totalorder %s88, %s89
    %p101 = scmp.eq.s32.totalorder %s16, 1
    %p102 = por %p100, %p101
    %p104 = scmp.ne.s32.totalorder %s89, %s103
    %p105 = scmp.eq.s32.totalorder %s16, 0
    %p106 = por %p104, %p105
    %s107 = ssub.s32 %s10, %s17
    %p108 = scmp.eq.s32.totalorder %s107, 0
    %s110 = sadd.s32 %s109, 1
    %s111 = scalar_select %p108, %s109, %s110
    %p114 = pneg %p108
    %p115 = scmp.eq.s32.totalorder %s10, 1
    %p116 = por %p114, %p115
    %p117 = scmp.ne.s32.totalorder %s109, %s112
    %p118 = scmp.eq.s32.totalorder %s10, 0
    %p119 = por %p117, %p118
    %p120 = scmp.ne.s32.totalorder %s109, %s112
    %p121 = scmp.eq.s32.totalorder %s15, 1
    %p122 = por %p120, %p121
    %p123 = scmp.ne.s32.totalorder %s112, %s113
    %p124 = scmp.eq.s32.totalorder %s15, 0
    %p125 = por %p123, %p124
    %p126 = scmp.ne.s32.totalorder %s112, %s113
    %p127 = scmp.eq.s32.totalorder %s16, 1
    %p128 = por %p126, %p127
    %p130 = scmp.ne.s32.totalorder %s113, %s129
    %p131 = scmp.eq.s32.totalorder %s16, 0
    %p132 = por %p130, %p131
    %p133 = scmp.le.s32.totalorder 1, %s10
    %p134 = scmp.lt.s32.totalorder %s10, 3
    %p135 = pnand %p133, %p134
    %p136 = pneg %p135
    // Predicated region
    $region9: #{batch_net_5_2_forward.1} parent=5 // pred_check
      _
    $region10: #{batch_net_5_2_forward.1} parent=5 // pred_check_branch
      %138 = sbr.rel (%p135) target = $region12
    $region11: #{batch_net_5_2_forward.1} parent=5 // pred_region
      %s139 = ssub.s32 %s10, 1
      // Predicated region
      $region13: #{batch_net_5_2_forward.1} parent=11 // pred_check
        %p140 = pneg %p57
      $region14: #{batch_net_5_2_forward.1} parent=11 // pred_check_branch
        %142 = sbr.rel (%p140) target = $region16
      $region15: #{batch_net_5_2_forward.1} parent=11 // pred_region
        _
      $region16: #{batch_net_5_2_forward.1} parent=11 // pred_fallthru
        _
      // Predicated region
      $region17: #{batch_net_5_2_forward.1} parent=11 // pred_check
        %p143 = pneg %p78
      $region18: #{batch_net_5_2_forward.1} parent=11 // pred_check_branch
        %145 = sbr.rel (%p143) target = $region20
      $region19: #{batch_net_5_2_forward.1} parent=11 // pred_region
        _
      $region20: #{batch_net_5_2_forward.1} parent=11 // pred_fallthru
        _
      // Predicated region
      $region21: #{batch_net_5_2_forward.1} parent=11 // pred_check
        %p146 = pneg %p99
      $region22: #{batch_net_5_2_forward.1} parent=11 // pred_check_branch
        %148 = sbr.rel (%p146) target = $region24
      $region23: #{batch_net_5_2_forward.1} parent=11 // pred_region
        _
      $region24: #{batch_net_5_2_forward.1} parent=11 // pred_fallthru
        _
    $region12: #{batch_net_5_2_forward.1} parent=5 // pred_fallthru
      _
    %p149 = scmp.lt.s32.totalorder %s10, 2
    // Predicated region
    $region25: #{batch_net_5_2_forward.1} parent=5 // pred_check
      %p150 = pneg %p149
    $region26: #{batch_net_5_2_forward.1} parent=5 // pred_check_branch
      %152 = sbr.rel (%p150) target = $region28
    $region27: #{batch_net_5_2_forward.1} parent=5 // pred_region
      // Predicated region
      $region29: #{batch_net_5_2_forward.1} parent=27 // pred_check
        %p153 = pneg %p30
      $region30: #{batch_net_5_2_forward.1} parent=27 // pred_check_branch
        %155 = sbr.rel (%p153) target = $region32
      $region31: #{batch_net_5_2_forward.1} parent=27 // pred_region
        %s156 = smul.u32 32, %s10
        %p157 = scmp.lt.s32.totalorder %s156, 63
        %s158 = scalar_select %p157, %s156, 63
        %s159 = smul.addr %s158, 4
        %s160 = scalar_lea.vmem %s0, %s159
        %s161 = smul.u32 32, %s10
      $region32: #{batch_net_5_2_forward.1} parent=27 // pred_fallthru
        _
    $region28: #{batch_net_5_2_forward.1} parent=5 // pred_fallthru
      _
    %p162 = scmp.le.s32.totalorder 1, %s10
    %p163 = scmp.lt.s32.totalorder %s10, 3
    %p164 = pnand %p162, %p163
    %p165 = pneg %p164
    // Predicated region
    $region33: #{batch_net_5_2_forward.1} parent=5 // pred_check
      _
    $region34: #{batch_net_5_2_forward.1} parent=5 // pred_check_branch
      %167 = sbr.rel (%p164) target = $region36
    $region35: #{batch_net_5_2_forward.1} parent=5 // pred_region
      %s168 = ssub.s32 %s10, 1
      %s169 = smul.u32 32, %s15
      %p170 = scmp.lt.s32.totalorder %s169, 63
      %s171 = scalar_select %p170, %s169, 63
      %s172 = smul.addr %s171, 4
      %s173 = scalar_lea.vmem %s0, %s172
      %p174 = pneg %p36
      %p175 = pneg %p33
      %p176 = pneg %p57
      %p177 = pneg %p54
      %p178 = pneg %p78
      %p179 = pneg %p75
      %p180 = pneg %p99
      %p181 = pneg %p96
      %p182 = pneg %p125
      %p183 = pneg %p122
      %s184 = smul.u32 32, %s15
      %p185 = scmp.lt.s32.totalorder %s184, 63
      %s186 = scalar_select %p185, %s184, 63
      %s187 = smul.addr %s186, 8
      %s188 = scalar_lea.vmem %s4, %s187
      %s189 = smul.u32 32, %s15
      %p190 = scmp.lt.s32.totalorder %s189, 63
      %s191 = scalar_select %p190, %s189, 63
      %s192 = smul.addr %s191, 4
      %s193 = scalar_lea.vmem %s0, %s192
      %s194 = smul.u32 32, %s15
      %s195 = smul.u32 32, %s15
      %p196 = scmp.lt.s32.totalorder %s195, 63
      %s197 = scalar_select %p196, %s195, 63
      %s198 = smul.addr %s197, 8
      %s199 = scalar_lea.vmem %s4, %s198
      %s200 = smul.u32 32, %s15
      %v202 = vld [vmem:[%s193] sm:$0xf]
      %v203 = vld [vmem:[%s193 + $0x4] sm:$0xf]
      %v204 = vld [vmem:[%s193 + $0x8] sm:$0xf]
      %v205 = vld [vmem:[%s193 + $0xc] sm:$0xf]
      %v206 = vld [vmem:[%s193 + $0x10] sm:$0xf]
      %v207 = vld [vmem:[%s193 + $0x14] sm:$0xf]
      %v208 = vld [vmem:[%s193 + $0x18] sm:$0xf]
      %v209 = vld [vmem:[%s193 + $0x1c] sm:$0xf]
      %v210 = vld [vmem:[%s193 + $0x20] sm:$0xf]
      %v211 = vld [vmem:[%s193 + $0x24] sm:$0xf]
      %v212 = vld [vmem:[%s193 + $0x28] sm:$0xf]
      %v213 = vld [vmem:[%s193 + $0x2c] sm:$0xf]
      %v214 = vld [vmem:[%s193 + $0x30] sm:$0xf]
      %v215 = vld [vmem:[%s193 + $0x34] sm:$0xf]
      %v216 = vld [vmem:[%s193 + $0x38] sm:$0xf]
      %v217 = vld [vmem:[%s193 + $0x3c] sm:$0xf]
      %v218 = vld [vmem:[%s193 + $0x40] sm:$0xf]
      %v219 = vld [vmem:[%s193 + $0x44] sm:$0xf]
      %v220 = vld [vmem:[%s193 + $0x48] sm:$0xf]
      %v221 = vld [vmem:[%s193 + $0x4c] sm:$0xf]
      %v222 = vld [vmem:[%s193 + $0x50] sm:$0xf]
      %v223 = vld [vmem:[%s193 + $0x54] sm:$0xf]
      %v224 = vld [vmem:[%s193 + $0x58] sm:$0xf]
      %v225 = vld [vmem:[%s193 + $0x5c] sm:$0xf]
      %v226 = vld [vmem:[%s193 + $0x60] sm:$0xf]
      %v227 = vld [vmem:[%s193 + $0x64] sm:$0xf]
      %v228 = vld [vmem:[%s193 + $0x68] sm:$0xf]
      %v229 = vld [vmem:[%s193 + $0x6c] sm:$0xf]
      %v230 = vld [vmem:[%s193 + $0x70] sm:$0xf]
      %v231 = vld [vmem:[%s193 + $0x74] sm:$0xf]
      %v232 = vld [vmem:[%s193 + $0x78] sm:$0xf]
      %v233 = vld [vmem:[%s193 + $0x7c] sm:$0xf]
      %v234 = vld [vmem:[%s1] sm:$0xf]
      %v235 = vld [vmem:[%s1 + $0x4] sm:$0xf]
      %v236 = vld [vmem:[%s1 + $0x8] sm:$0xf]
      %v237 = vld [vmem:[%s1 + $0xc] sm:$0xf]
      %v238 = vld [vmem:[%s3] sm:$0x1]
      %v240 = vlaneseq
      %v241 = vshrl.u32 %v240, 7
      %v242 = vsub.s32 0, %v241
      %v243 = vrot.slane %v238, %v242
      %v277 = vunpack.c.l.b16 %v202
      %v278 = vunpack.c.l.b16 %v203
      %v279 = vunpack.c.l.b16 %v204
      %v280 = vunpack.c.l.b16 %v205
      %v281 = vunpack.c.l.b16 %v206
      %v282 = vunpack.c.l.b16 %v207
      %v283 = vunpack.c.l.b16 %v208
      %v284 = vunpack.c.l.b16 %v209
      %v285 = vunpack.c.l.b16 %v210
      %v286 = vunpack.c.l.b16 %v211
      %v287 = vunpack.c.l.b16 %v212
      %v288 = vunpack.c.l.b16 %v213
      %v289 = vunpack.c.l.b16 %v214
      %v290 = vunpack.c.l.b16 %v215
      %v291 = vunpack.c.l.b16 %v216
      %v292 = vunpack.c.l.b16 %v217
      %v293 = vunpack.c.l.b16 %v218
      %v294 = vunpack.c.l.b16 %v219
      %v295 = vunpack.c.l.b16 %v220
      %v296 = vunpack.c.l.b16 %v221
      %v297 = vunpack.c.l.b16 %v222
      %v298 = vunpack.c.l.b16 %v223
      %v299 = vunpack.c.l.b16 %v224
      %v300 = vunpack.c.l.b16 %v225
      %v301 = vunpack.c.l.b16 %v226
      %v302 = vunpack.c.l.b16 %v227
      %v303 = vunpack.c.l.b16 %v228
      %v304 = vunpack.c.l.b16 %v229
      %v305 = vunpack.c.l.b16 %v230
      %v306 = vunpack.c.l.b16 %v231
      %v307 = vunpack.c.l.b16 %v232
      %v308 = vunpack.c.l.b16 %v233
      %v309 = vpack.c.b16 %v278, %v277
      %v310 = vpack.c.b16 %v280, %v279
      %v311 = vpack.c.b16 %v282, %v281
      %v312 = vpack.c.b16 %v284, %v283
      %v313 = vpack.c.b16 %v286, %v285
      %v314 = vpack.c.b16 %v288, %v287
      %v315 = vpack.c.b16 %v290, %v289
      %v316 = vpack.c.b16 %v292, %v291
      %v317 = vpack.c.b16 %v294, %v293
      %v318 = vpack.c.b16 %v296, %v295
      %v319 = vpack.c.b16 %v298, %v297
      %v320 = vpack.c.b16 %v300, %v299
      %v321 = vpack.c.b16 %v302, %v301
      %v322 = vpack.c.b16 %v304, %v303
      %v323 = vpack.c.b16 %v306, %v305
      %v324 = vpack.c.b16 %v308, %v307
      %v329 = vunpack.c.l.b16 %v234
      %v330 = vunpack.c.l.b16 %v235
      %v331 = vunpack.c.l.b16 %v236
      %v332 = vunpack.c.l.b16 %v237
      %v333 = vpack.c.b16 %v330, %v329
      %v334 = vpack.c.b16 %v332, %v331
      %vm337 = vcmask 261120
      %v339 = vsel %vm337, %v309, 0
      %v342 = vsel %vm337, %v310, 0
      %v345 = vsel %vm337, %v311, 0
      %v348 = vsel %vm337, %v312, 0
      %v351 = vsel %vm337, %v313, 0
      %v354 = vsel %vm337, %v314, 0
      %v357 = vsel %vm337, %v315, 0
      %v360 = vsel %vm337, %v316, 0
      %v363 = vsel %vm337, %v317, 0
      %v366 = vsel %vm337, %v318, 0
      %v369 = vsel %vm337, %v319, 0
      %v372 = vsel %vm337, %v320, 0
      %v375 = vsel %vm337, %v321, 0
      %v378 = vsel %vm337, %v322, 0
      %v381 = vsel %vm337, %v323, 0
      %v384 = vsel %vm337, %v324, 0
      %386 = vmatprep.subr.bf16.mxu0 0
      %387 = vmatpush1.bf16.msra.mxu0 0
      %388 = vmatprep.subr.bf16.mxu0 0
      %389 = vmatpush1.bf16.msra.mxu0 0
      %390 = vmatprep.subr.bf16.mxu0 0
      %391 = vmatpush1.bf16.msra.mxu0 0
      %392 = vmatprep.subr.bf16.mxu0 0
      %393 = vmatpush1.bf16.msra.mxu0 0
      %394 = vmatprep.subr.bf16.mxu0 0
      %395 = vmatpush1.bf16.msra.mxu0 0
      %396 = vmatprep.subr.bf16.mxu0 0
      %397 = vmatpush1.bf16.msra.mxu0 0
      %398 = vmatprep.subr.bf16.mxu0 0
      %399 = vmatpush1.bf16.msra.mxu0 %v334
      %400 = vmatprep.subr.bf16.mxu0 0
      %401 = vmatpush1.bf16.msra.mxu0 %v333
      %402 = vmatprep.subr.bf16.mxu0 0
      %403 = vmatpush2.bf16.msra.mxu0 0
      %404 = vmatprep.subr.bf16.mxu0 0
      %405 = vmatpush2.bf16.msra.mxu0 0
      %406 = vmatprep.subr.bf16.mxu0 0
      %407 = vmatpush2.bf16.msra.mxu0 0
      %408 = vmatprep.subr.bf16.mxu0 0
      %409 = vmatpush2.bf16.msra.mxu0 0
      %410 = vmatprep.subr.bf16.mxu0 0
      %411 = vmatpush2.bf16.msra.mxu0 0
      %412 = vmatprep.subr.bf16.mxu0 0
      %413 = vmatpush2.bf16.msra.mxu0 0
      %414 = vmatprep.subr.bf16.mxu0 0
      %415 = vmatpush2.bf16.msra.mxu0 0
      %416 = vmatprep.subr.bf16.mxu0 0
      %417 = vmatpush2.bf16.msra.mxu0 0
      %418 = vmatprep.mubr.bf16.mxu0 0
      %419 = vmatmul.mubr.bf16.gmra.mxu0 %v339
      %v420 = vpop.f32.mrf.mxu0
      %v421 = vadd.f32 %v243, %v420
      %v422 = vpop.f32.mrf.mxu0
      %v423 = vpop.f32.mrf.mxu0
      %v424 = vadd.f32 %v243, %v423
      %v425 = vpop.f32.mrf.mxu0
      %426 = vmatprep.mubr.bf16.mxu0 0
      %427 = vmatmul.mubr.bf16.gmra.mxu0 %v342
      %v428 = vpop.f32.mrf.mxu0
      %v429 = vadd.f32 %v243, %v428
      %v430 = vpop.f32.mrf.mxu0
      %v431 = vpop.f32.mrf.mxu0
      %v432 = vadd.f32 %v243, %v431
      %v433 = vpop.f32.mrf.mxu0
      %434 = vmatprep.mubr.bf16.mxu0 0
      %435 = vmatmul.mubr.bf16.gmra.mxu0 %v345
      %v436 = vpop.f32.mrf.mxu0
      %v437 = vadd.f32 %v243, %v436
      %v438 = vpop.f32.mrf.mxu0
      %v439 = vpop.f32.mrf.mxu0
      %v440 = vadd.f32 %v243, %v439
      %v441 = vpop.f32.mrf.mxu0
      %442 = vmatprep.mubr.bf16.mxu0 0
      %443 = vmatmul.mubr.bf16.gmra.mxu0 %v348
      %v444 = vpop.f32.mrf.mxu0
      %v445 = vadd.f32 %v243, %v444
      %v446 = vpop.f32.mrf.mxu0
      %v447 = vpop.f32.mrf.mxu0
      %v448 = vadd.f32 %v243, %v447
      %v449 = vpop.f32.mrf.mxu0
      %450 = vmatprep.mubr.bf16.mxu0 0
      %451 = vmatmul.mubr.bf16.gmra.mxu0 %v351
      %v452 = vpop.f32.mrf.mxu0
      %v453 = vadd.f32 %v243, %v452
      %v454 = vpop.f32.mrf.mxu0
      %v455 = vpop.f32.mrf.mxu0
      %v456 = vadd.f32 %v243, %v455
      %v457 = vpop.f32.mrf.mxu0
      %458 = vmatprep.mubr.bf16.mxu0 0
      %459 = vmatmul.mubr.bf16.gmra.mxu0 %v354
      %v460 = vpop.f32.mrf.mxu0
      %v461 = vadd.f32 %v243, %v460
      %v462 = vpop.f32.mrf.mxu0
      %v463 = vpop.f32.mrf.mxu0
      %v464 = vadd.f32 %v243, %v463
      %v465 = vpop.f32.mrf.mxu0
      %466 = vmatprep.mubr.bf16.mxu0 0
      %467 = vmatmul.mubr.bf16.gmra.mxu0 %v357
      %v468 = vpop.f32.mrf.mxu0
      %v469 = vadd.f32 %v243, %v468
      %v470 = vpop.f32.mrf.mxu0
      %v471 = vpop.f32.mrf.mxu0
      %v472 = vadd.f32 %v243, %v471
      %v473 = vpop.f32.mrf.mxu0
      %474 = vmatprep.mubr.bf16.mxu0 0
      %475 = vmatmul.mubr.bf16.gmra.mxu0 %v360
      %v476 = vpop.f32.mrf.mxu0
      %v477 = vadd.f32 %v243, %v476
      %v478 = vpop.f32.mrf.mxu0
      %v479 = vpop.f32.mrf.mxu0
      %v480 = vadd.f32 %v243, %v479
      %v481 = vpop.f32.mrf.mxu0
      %482 = vmatprep.mubr.bf16.mxu0 0
      %483 = vmatmul.mubr.bf16.gmra.mxu0 %v363
      %v484 = vpop.f32.mrf.mxu0
      %v485 = vadd.f32 %v243, %v484
      %v486 = vpop.f32.mrf.mxu0
      %v487 = vpop.f32.mrf.mxu0
      %v488 = vadd.f32 %v243, %v487
      %v489 = vpop.f32.mrf.mxu0
      %490 = vmatprep.mubr.bf16.mxu0 0
      %491 = vmatmul.mubr.bf16.gmra.mxu0 %v366
      %v492 = vpop.f32.mrf.mxu0
      %v493 = vadd.f32 %v243, %v492
      %v494 = vpop.f32.mrf.mxu0
      %v495 = vpop.f32.mrf.mxu0
      %v496 = vadd.f32 %v243, %v495
      %v497 = vpop.f32.mrf.mxu0
      %498 = vmatprep.mubr.bf16.mxu0 0
      %499 = vmatmul.mubr.bf16.gmra.mxu0 %v369
      %v500 = vpop.f32.mrf.mxu0
      %v501 = vadd.f32 %v243, %v500
      %v502 = vpop.f32.mrf.mxu0
      %v503 = vpop.f32.mrf.mxu0
      %v504 = vadd.f32 %v243, %v503
      %v505 = vpop.f32.mrf.mxu0
      %506 = vmatprep.mubr.bf16.mxu0 0
      %507 = vmatmul.mubr.bf16.gmra.mxu0 %v372
      %v508 = vpop.f32.mrf.mxu0
      %v509 = vadd.f32 %v243, %v508
      %v510 = vpop.f32.mrf.mxu0
      %v511 = vpop.f32.mrf.mxu0
      %v512 = vadd.f32 %v243, %v511
      %v513 = vpop.f32.mrf.mxu0
      %514 = vmatprep.mubr.bf16.mxu0 0
      %515 = vmatmul.mubr.bf16.gmra.mxu0 %v375
      %v516 = vpop.f32.mrf.mxu0
      %v517 = vadd.f32 %v243, %v516
      %v518 = vpop.f32.mrf.mxu0
      %v519 = vpop.f32.mrf.mxu0
      %v520 = vadd.f32 %v243, %v519
      %v521 = vpop.f32.mrf.mxu0
      %522 = vmatprep.mubr.bf16.mxu0 0
      %523 = vmatmul.mubr.bf16.gmra.mxu0 %v378
      %v524 = vpop.f32.mrf.mxu0
      %v525 = vadd.f32 %v243, %v524
      %v526 = vpop.f32.mrf.mxu0
      %v527 = vpop.f32.mrf.mxu0
      %v528 = vadd.f32 %v243, %v527
      %v529 = vpop.f32.mrf.mxu0
      %530 = vmatprep.mubr.bf16.mxu0 0
      %531 = vmatmul.mubr.bf16.gmra.mxu0 %v381
      %v532 = vpop.f32.mrf.mxu0
      %v533 = vadd.f32 %v243, %v532
      %v534 = vpop.f32.mrf.mxu0
      %v535 = vpop.f32.mrf.mxu0
      %v536 = vadd.f32 %v243, %v535
      %v537 = vpop.f32.mrf.mxu0
      %538 = vmatprep.mubr.bf16.mxu0 0
      %539 = vmatmul.mubr.bf16.gmra.mxu0 %v384
      %v540 = vpop.f32.mrf.mxu0
      %v541 = vadd.f32 %v243, %v540
      %v542 = vpop.f32.mrf.mxu0
      %v543 = vpop.f32.mrf.mxu0
      %v544 = vadd.f32 %v243, %v543
      %v545 = vpop.f32.mrf.mxu0
      %546 = vdwg.mxu0
      %v547 = vmax.f32 %v421, 0.0
      %v548 = vmax.f32 %v424, 0.0
      %v549 = vmax.f32 %v429, 0.0
      %v550 = vmax.f32 %v432, 0.0
      %v551 = vmax.f32 %v437, 0.0
      %v552 = vmax.f32 %v440, 0.0
      %v553 = vmax.f32 %v445, 0.0
      %v554 = vmax.f32 %v448, 0.0
      %v555 = vmax.f32 %v453, 0.0
      %v556 = vmax.f32 %v456, 0.0
      %v557 = vmax.f32 %v461, 0.0
      %v558 = vmax.f32 %v464, 0.0
      %v559 = vmax.f32 %v469, 0.0
      %v560 = vmax.f32 %v472, 0.0
      %v561 = vmax.f32 %v477, 0.0
      %v562 = vmax.f32 %v480, 0.0
      %v563 = vmax.f32 %v485, 0.0
      %v564 = vmax.f32 %v488, 0.0
      %v565 = vmax.f32 %v493, 0.0
      %v566 = vmax.f32 %v496, 0.0
      %v567 = vmax.f32 %v501, 0.0
      %v568 = vmax.f32 %v504, 0.0
      %v569 = vmax.f32 %v509, 0.0
      %v570 = vmax.f32 %v512, 0.0
      %v571 = vmax.f32 %v517, 0.0
      %v572 = vmax.f32 %v520, 0.0
      %v573 = vmax.f32 %v525, 0.0
      %v574 = vmax.f32 %v528, 0.0
      %v575 = vmax.f32 %v533, 0.0
      %v576 = vmax.f32 %v536, 0.0
      %v577 = vmax.f32 %v541, 0.0
      %v578 = vmax.f32 %v544, 0.0
      %v579 = vpack.c.bf16 %v548, %v547
      %v580 = vpack.c.bf16 %v550, %v549
      %v581 = vpack.c.bf16 %v552, %v551
      %v582 = vpack.c.bf16 %v554, %v553
      %v583 = vpack.c.bf16 %v556, %v555
      %v584 = vpack.c.bf16 %v558, %v557
      %v585 = vpack.c.bf16 %v560, %v559
      %v586 = vpack.c.bf16 %v562, %v561
      %v587 = vpack.c.bf16 %v564, %v563
      %v588 = vpack.c.bf16 %v566, %v565
      %v589 = vpack.c.bf16 %v568, %v567
      %v590 = vpack.c.bf16 %v570, %v569
      %v591 = vpack.c.bf16 %v572, %v571
      %v592 = vpack.c.bf16 %v574, %v573
      %v593 = vpack.c.bf16 %v576, %v575
      %v594 = vpack.c.bf16 %v578, %v577
      %v595 = vld [vmem:[%s2] sm:$0xf]
      %v596 = vld [vmem:[%s2 + $0x4] sm:$0xf]
      %v597 = vld [vmem:[%s2 + $0x8] sm:$0xf]
      %v598 = vld [vmem:[%s2 + $0xc] sm:$0xf]
      %v599 = vld [vmem:[%s2 + $0x10] sm:$0xf]
      %v600 = vld [vmem:[%s2 + $0x14] sm:$0xf]
      %v601 = vld [vmem:[%s2 + $0x18] sm:$0xf]
      %v602 = vld [vmem:[%s2 + $0x1c] sm:$0xf]
      %v603 = vld [vmem:[%s2 + $0x20] sm:$0xf]
      %v604 = vld [vmem:[%s2 + $0x24] sm:$0xf]
      %v605 = vld [vmem:[%s2 + $0x28] sm:$0xf]
      %v606 = vld [vmem:[%s2 + $0x2c] sm:$0xf]
      %v607 = vld [vmem:[%s2 + $0x30] sm:$0xf]
      %v608 = vld [vmem:[%s2 + $0x34] sm:$0xf]
      %v609 = vld [vmem:[%s2 + $0x38] sm:$0xf]
      %v610 = vld [vmem:[%s2 + $0x3c] sm:$0xf]
      %s611 = scalar_lea.vmem %s3, 1
      %v612 = vld [vmem:[%s611] sm:$0x1]
      %v614 = vlaneseq
      %v615 = vshrl.u32 %v614, 7
      %v616 = vsub.s32 0, %v615
      %v617 = vrot.slane %v612, %v616
      %v635 = vunpack.c.l.b16 %v595
      %v636 = vunpack.c.l.b16 %v596
      %v637 = vunpack.c.l.b16 %v597
      %v638 = vunpack.c.l.b16 %v598
      %v639 = vunpack.c.l.b16 %v599
      %v640 = vunpack.c.l.b16 %v600
      %v641 = vunpack.c.l.b16 %v601
      %v642 = vunpack.c.l.b16 %v602
      %v643 = vunpack.c.l.b16 %v603
      %v644 = vunpack.c.l.b16 %v604
      %v645 = vunpack.c.l.b16 %v605
      %v646 = vunpack.c.l.b16 %v606
      %v647 = vunpack.c.l.b16 %v607
      %v648 = vunpack.c.l.b16 %v608
      %v649 = vunpack.c.l.b16 %v609
      %v650 = vunpack.c.l.b16 %v610
      %v651 = vpack.c.b16 %v636, %v635
      %v652 = vpack.c.b16 %v638, %v637
      %v653 = vpack.c.b16 %v640, %v639
      %v654 = vpack.c.b16 %v642, %v641
      %v655 = vpack.c.b16 %v644, %v643
      %v656 = vpack.c.b16 %v646, %v645
      %v657 = vpack.c.b16 %v648, %v647
      %v658 = vpack.c.b16 %v650, %v649
      %667 = vmatprep.subr.bf16.mxu0 0
      %668 = vmatpush1.bf16.msra.mxu0 %v658
      %669 = vmatprep.subr.bf16.mxu0 0
      %670 = vmatpush1.bf16.msra.mxu0 %v657
      %671 = vmatprep.subr.bf16.mxu0 0
      %672 = vmatpush1.bf16.msra.mxu0 %v656
      %673 = vmatprep.subr.bf16.mxu0 0
      %674 = vmatpush1.bf16.msra.mxu0 %v655
      %675 = vmatprep.subr.bf16.mxu0 0
      %676 = vmatpush1.bf16.msra.mxu0 %v654
      %677 = vmatprep.subr.bf16.mxu0 0
      %678 = vmatpush1.bf16.msra.mxu0 %v653
      %679 = vmatprep.subr.bf16.mxu0 0
      %680 = vmatpush1.bf16.msra.mxu0 %v652
      %681 = vmatprep.subr.bf16.mxu0 0
      %682 = vmatpush1.bf16.msra.mxu0 %v651
      %683 = vmatprep.subr.bf16.mxu0 0
      %684 = vmatpush2.bf16.msra.mxu0 0
      %685 = vmatprep.subr.bf16.mxu0 0
      %686 = vmatpush2.bf16.msra.mxu0 0
      %687 = vmatprep.subr.bf16.mxu0 0
      %688 = vmatpush2.bf16.msra.mxu0 0
      %689 = vmatprep.subr.bf16.mxu0 0
      %690 = vmatpush2.bf16.msra.mxu0 0
      %691 = vmatprep.subr.bf16.mxu0 0
      %692 = vmatpush2.bf16.msra.mxu0 0
      %693 = vmatprep.subr.bf16.mxu0 0
      %694 = vmatpush2.bf16.msra.mxu0 0
      %695 = vmatprep.subr.bf16.mxu0 0
      %696 = vmatpush2.bf16.msra.mxu0 0
      %697 = vmatprep.subr.bf16.mxu0 0
      %698 = vmatpush2.bf16.msra.mxu0 0
      %699 = vmatprep.mubr.bf16.mxu0 0
      %700 = vmatmul.mubr.bf16.gmra.mxu0 %v579
      %v701 = vpop.f32.mrf.mxu0
      %v702 = vadd.f32 %v617, %v701
      %v703 = vpop.f32.mrf.mxu0
      %v704 = vpop.f32.mrf.mxu0
      %v705 = vadd.f32 %v617, %v704
      %v706 = vpop.f32.mrf.mxu0
      %707 = vmatprep.mubr.bf16.mxu0 0
      %708 = vmatmul.mubr.bf16.gmra.mxu0 %v580
      %v709 = vpop.f32.mrf.mxu0
      %v710 = vadd.f32 %v617, %v709
      %v711 = vpop.f32.mrf.mxu0
      %v712 = vpop.f32.mrf.mxu0
      %v713 = vadd.f32 %v617, %v712
      %v714 = vpop.f32.mrf.mxu0
      %715 = vmatprep.mubr.bf16.mxu0 0
      %716 = vmatmul.mubr.bf16.gmra.mxu0 %v581
      %v717 = vpop.f32.mrf.mxu0
      %v718 = vadd.f32 %v617, %v717
      %v719 = vpop.f32.mrf.mxu0
      %v720 = vpop.f32.mrf.mxu0
      %v721 = vadd.f32 %v617, %v720
      %v722 = vpop.f32.mrf.mxu0
      %723 = vmatprep.mubr.bf16.mxu0 0
      %724 = vmatmul.mubr.bf16.gmra.mxu0 %v582
      %v725 = vpop.f32.mrf.mxu0
      %v726 = vadd.f32 %v617, %v725
      %v727 = vpop.f32.mrf.mxu0
      %v728 = vpop.f32.mrf.mxu0
      %v729 = vadd.f32 %v617, %v728
      %v730 = vpop.f32.mrf.mxu0
      %731 = vmatprep.mubr.bf16.mxu0 0
      %732 = vmatmul.mubr.bf16.gmra.mxu0 %v583
      %v733 = vpop.f32.mrf.mxu0
      %v734 = vadd.f32 %v617, %v733
      %v735 = vpop.f32.mrf.mxu0
      %v736 = vpop.f32.mrf.mxu0
      %v737 = vadd.f32 %v617, %v736
      %v738 = vpop.f32.mrf.mxu0
      %739 = vmatprep.mubr.bf16.mxu0 0
      %740 = vmatmul.mubr.bf16.gmra.mxu0 %v584
      %v741 = vpop.f32.mrf.mxu0
      %v742 = vadd.f32 %v617, %v741
      %v743 = vpop.f32.mrf.mxu0
      %v744 = vpop.f32.mrf.mxu0
      %v745 = vadd.f32 %v617, %v744
      %v746 = vpop.f32.mrf.mxu0
      %747 = vmatprep.mubr.bf16.mxu0 0
      %748 = vmatmul.mubr.bf16.gmra.mxu0 %v585
      %v749 = vpop.f32.mrf.mxu0
      %v750 = vadd.f32 %v617, %v749
      %v751 = vpop.f32.mrf.mxu0
      %v752 = vpop.f32.mrf.mxu0
      %v753 = vadd.f32 %v617, %v752
      %v754 = vpop.f32.mrf.mxu0
      %755 = vmatprep.mubr.bf16.mxu0 0
      %756 = vmatmul.mubr.bf16.gmra.mxu0 %v586
      %v757 = vpop.f32.mrf.mxu0
      %v758 = vadd.f32 %v617, %v757
      %v759 = vpop.f32.mrf.mxu0
      %v760 = vpop.f32.mrf.mxu0
      %v761 = vadd.f32 %v617, %v760
      %v762 = vpop.f32.mrf.mxu0
      %763 = vmatprep.mubr.bf16.mxu0 0
      %764 = vmatmul.mubr.bf16.gmra.mxu0 %v587
      %v765 = vpop.f32.mrf.mxu0
      %v766 = vadd.f32 %v617, %v765
      %v767 = vpop.f32.mrf.mxu0
      %v768 = vpop.f32.mrf.mxu0
      %v769 = vadd.f32 %v617, %v768
      %v770 = vpop.f32.mrf.mxu0
      %771 = vmatprep.mubr.bf16.mxu0 0
      %772 = vmatmul.mubr.bf16.gmra.mxu0 %v588
      %v773 = vpop.f32.mrf.mxu0
      %v774 = vadd.f32 %v617, %v773
      %v775 = vpop.f32.mrf.mxu0
      %v776 = vpop.f32.mrf.mxu0
      %v777 = vadd.f32 %v617, %v776
      %v778 = vpop.f32.mrf.mxu0
      %779 = vmatprep.mubr.bf16.mxu0 0
      %780 = vmatmul.mubr.bf16.gmra.mxu0 %v589
      %v781 = vpop.f32.mrf.mxu0
      %v782 = vadd.f32 %v617, %v781
      %v783 = vpop.f32.mrf.mxu0
      %v784 = vpop.f32.mrf.mxu0
      %v785 = vadd.f32 %v617, %v784
      %v786 = vpop.f32.mrf.mxu0
      %787 = vmatprep.mubr.bf16.mxu0 0
      %788 = vmatmul.mubr.bf16.gmra.mxu0 %v590
      %v789 = vpop.f32.mrf.mxu0
      %v790 = vadd.f32 %v617, %v789
      %v791 = vpop.f32.mrf.mxu0
      %v792 = vpop.f32.mrf.mxu0
      %v793 = vadd.f32 %v617, %v792
      %v794 = vpop.f32.mrf.mxu0
      %795 = vmatprep.mubr.bf16.mxu0 0
      %796 = vmatmul.mubr.bf16.gmra.mxu0 %v591
      %v797 = vpop.f32.mrf.mxu0
      %v798 = vadd.f32 %v617, %v797
      %v799 = vpop.f32.mrf.mxu0
      %v800 = vpop.f32.mrf.mxu0
      %v801 = vadd.f32 %v617, %v800
      %v802 = vpop.f32.mrf.mxu0
      %803 = vmatprep.mubr.bf16.mxu0 0
      %804 = vmatmul.mubr.bf16.gmra.mxu0 %v592
      %v805 = vpop.f32.mrf.mxu0
      %v806 = vadd.f32 %v617, %v805
      %v807 = vpop.f32.mrf.mxu0
      %v808 = vpop.f32.mrf.mxu0
      %v809 = vadd.f32 %v617, %v808
      %v810 = vpop.f32.mrf.mxu0
      %811 = vmatprep.mubr.bf16.mxu0 0
      %812 = vmatmul.mubr.bf16.gmra.mxu0 %v593
      %v813 = vpop.f32.mrf.mxu0
      %v814 = vadd.f32 %v617, %v813
      %v815 = vpop.f32.mrf.mxu0
      %v816 = vpop.f32.mrf.mxu0
      %v817 = vadd.f32 %v617, %v816
      %v818 = vpop.f32.mrf.mxu0
      %819 = vmatprep.mubr.bf16.mxu0 0
      %820 = vmatmul.mubr.bf16.gmra.mxu0 %v594
      %v821 = vpop.f32.mrf.mxu0
      %v822 = vadd.f32 %v617, %v821
      %v823 = vpop.f32.mrf.mxu0
      %v824 = vpop.f32.mrf.mxu0
      %v825 = vadd.f32 %v617, %v824
      %v826 = vpop.f32.mrf.mxu0
      %827 = vdwg.mxu0
      %v828 = vmax.f32 %v702, 0.0
      %v829 = vmax.f32 %v705, 0.0
      %v830 = vmax.f32 %v710, 0.0
      %v831 = vmax.f32 %v713, 0.0
      %v832 = vmax.f32 %v718, 0.0
      %v833 = vmax.f32 %v721, 0.0
      %v834 = vmax.f32 %v726, 0.0
      %v835 = vmax.f32 %v729, 0.0
      %v836 = vmax.f32 %v734, 0.0
      %v837 = vmax.f32 %v737, 0.0
      %v838 = vmax.f32 %v742, 0.0
      %v839 = vmax.f32 %v745, 0.0
      %v840 = vmax.f32 %v750, 0.0
      %v841 = vmax.f32 %v753, 0.0
      %v842 = vmax.f32 %v758, 0.0
      %v843 = vmax.f32 %v761, 0.0
      %v844 = vmax.f32 %v766, 0.0
      %v845 = vmax.f32 %v769, 0.0
      %v846 = vmax.f32 %v774, 0.0
      %v847 = vmax.f32 %v777, 0.0
      %v848 = vmax.f32 %v782, 0.0
      %v849 = vmax.f32 %v785, 0.0
      %v850 = vmax.f32 %v790, 0.0
      %v851 = vmax.f32 %v793, 0.0
      %v852 = vmax.f32 %v798, 0.0
      %v853 = vmax.f32 %v801, 0.0
      %v854 = vmax.f32 %v806, 0.0
      %v855 = vmax.f32 %v809, 0.0
      %v856 = vmax.f32 %v814, 0.0
      %v857 = vmax.f32 %v817, 0.0
      %v858 = vmax.f32 %v822, 0.0
      %v859 = vmax.f32 %v825, 0.0
      %v860 = vpack.c.bf16 %v829, %v828
      %v861 = vpack.c.bf16 %v831, %v830
      %v862 = vpack.c.bf16 %v833, %v832
      %v863 = vpack.c.bf16 %v835, %v834
      %v864 = vpack.c.bf16 %v837, %v836
      %v865 = vpack.c.bf16 %v839, %v838
      %v866 = vpack.c.bf16 %v841, %v840
      %v867 = vpack.c.bf16 %v843, %v842
      %v868 = vpack.c.bf16 %v845, %v844
      %v869 = vpack.c.bf16 %v847, %v846
      %v870 = vpack.c.bf16 %v849, %v848
      %v871 = vpack.c.bf16 %v851, %v850
      %v872 = vpack.c.bf16 %v853, %v852
      %v873 = vpack.c.bf16 %v855, %v854
      %v874 = vpack.c.bf16 %v857, %v856
      %v875 = vpack.c.bf16 %v859, %v858
      %s876 = scalar_lea.vmem %s2, 64
      %v877 = vld [vmem:[%s876] sm:$0xf]
      %v878 = vld [vmem:[%s876 + $0x4] sm:$0xf]
      %v879 = vld [vmem:[%s876 + $0x8] sm:$0xf]
      %v880 = vld [vmem:[%s876 + $0xc] sm:$0xf]
      %v881 = vld [vmem:[%s876 + $0x10] sm:$0xf]
      %v882 = vld [vmem:[%s876 + $0x14] sm:$0xf]
      %v883 = vld [vmem:[%s876 + $0x18] sm:$0xf]
      %v884 = vld [vmem:[%s876 + $0x1c] sm:$0xf]
      %v885 = vld [vmem:[%s876 + $0x20] sm:$0xf]
      %v886 = vld [vmem:[%s876 + $0x24] sm:$0xf]
      %v887 = vld [vmem:[%s876 + $0x28] sm:$0xf]
      %v888 = vld [vmem:[%s876 + $0x2c] sm:$0xf]
      %v889 = vld [vmem:[%s876 + $0x30] sm:$0xf]
      %v890 = vld [vmem:[%s876 + $0x34] sm:$0xf]
      %v891 = vld [vmem:[%s876 + $0x38] sm:$0xf]
      %v892 = vld [vmem:[%s876 + $0x3c] sm:$0xf]
      %s893 = scalar_lea.vmem %s3, 2
      %v894 = vld [vmem:[%s893] sm:$0x1]
      %v896 = vlaneseq
      %v897 = vshrl.u32 %v896, 7
      %v898 = vsub.s32 0, %v897
      %v899 = vrot.slane %v894, %v898
      %v917 = vunpack.c.l.b16 %v877
      %v918 = vunpack.c.l.b16 %v878
      %v919 = vunpack.c.l.b16 %v879
      %v920 = vunpack.c.l.b16 %v880
      %v921 = vunpack.c.l.b16 %v881
      %v922 = vunpack.c.l.b16 %v882
      %v923 = vunpack.c.l.b16 %v883
      %v924 = vunpack.c.l.b16 %v884
      %v925 = vunpack.c.l.b16 %v885
      %v926 = vunpack.c.l.b16 %v886
      %v927 = vunpack.c.l.b16 %v887
      %v928 = vunpack.c.l.b16 %v888
      %v929 = vunpack.c.l.b16 %v889
      %v930 = vunpack.c.l.b16 %v890
      %v931 = vunpack.c.l.b16 %v891
      %v932 = vunpack.c.l.b16 %v892
      %v933 = vpack.c.b16 %v918, %v917
      %v934 = vpack.c.b16 %v920, %v919
      %v935 = vpack.c.b16 %v922, %v921
      %v936 = vpack.c.b16 %v924, %v923
      %v937 = vpack.c.b16 %v926, %v925
      %v938 = vpack.c.b16 %v928, %v927
      %v939 = vpack.c.b16 %v930, %v929
      %v940 = vpack.c.b16 %v932, %v931
      %949 = vmatprep.subr.bf16.mxu0 0
      %950 = vmatpush1.bf16.msra.mxu0 %v940
      %951 = vmatprep.subr.bf16.mxu0 0
      %952 = vmatpush1.bf16.msra.mxu0 %v939
      %953 = vmatprep.subr.bf16.mxu0 0
      %954 = vmatpush1.bf16.msra.mxu0 %v938
      %955 = vmatprep.subr.bf16.mxu0 0
      %956 = vmatpush1.bf16.msra.mxu0 %v937
      %957 = vmatprep.subr.bf16.mxu0 0
      %958 = vmatpush1.bf16.msra.mxu0 %v936
      %959 = vmatprep.subr.bf16.mxu0 0
      %960 = vmatpush1.bf16.msra.mxu0 %v935
      %961 = vmatprep.subr.bf16.mxu0 0
      %962 = vmatpush1.bf16.msra.mxu0 %v934
      %963 = vmatprep.subr.bf16.mxu0 0
      %964 = vmatpush1.bf16.msra.mxu0 %v933
      %965 = vmatprep.subr.bf16.mxu0 0
      %966 = vmatpush2.bf16.msra.mxu0 0
      %967 = vmatprep.subr.bf16.mxu0 0
      %968 = vmatpush2.bf16.msra.mxu0 0
      %969 = vmatprep.subr.bf16.mxu0 0
      %970 = vmatpush2.bf16.msra.mxu0 0
      %971 = vmatprep.subr.bf16.mxu0 0
      %972 = vmatpush2.bf16.msra.mxu0 0
      %973 = vmatprep.subr.bf16.mxu0 0
      %974 = vmatpush2.bf16.msra.mxu0 0
      %975 = vmatprep.subr.bf16.mxu0 0
      %976 = vmatpush2.bf16.msra.mxu0 0
      %977 = vmatprep.subr.bf16.mxu0 0
      %978 = vmatpush2.bf16.msra.mxu0 0
      %979 = vmatprep.subr.bf16.mxu0 0
      %980 = vmatpush2.bf16.msra.mxu0 0
      %981 = vmatprep.mubr.bf16.mxu0 0
      %982 = vmatmul.mubr.bf16.gmra.mxu0 %v860
      %v983 = vpop.f32.mrf.mxu0
      %v984 = vadd.f32 %v899, %v983
      %v985 = vpop.f32.mrf.mxu0
      %v986 = vpop.f32.mrf.mxu0
      %v987 = vadd.f32 %v899, %v986
      %v988 = vpop.f32.mrf.mxu0
      %989 = vmatprep.mubr.bf16.mxu0 0
      %990 = vmatmul.mubr.bf16.gmra.mxu0 %v861
      %v991 = vpop.f32.mrf.mxu0
      %v992 = vadd.f32 %v899, %v991
      %v993 = vpop.f32.mrf.mxu0
      %v994 = vpop.f32.mrf.mxu0
      %v995 = vadd.f32 %v899, %v994
      %v996 = vpop.f32.mrf.mxu0
      %997 = vmatprep.mubr.bf16.mxu0 0
      %998 = vmatmul.mubr.bf16.gmra.mxu0 %v862
      %v999 = vpop.f32.mrf.mxu0
      %v1000 = vadd.f32 %v899, %v999
      %v1001 = vpop.f32.mrf.mxu0
      %v1002 = vpop.f32.mrf.mxu0
      %v1003 = vadd.f32 %v899, %v1002
      %v1004 = vpop.f32.mrf.mxu0
      %1005 = vmatprep.mubr.bf16.mxu0 0
      %1006 = vmatmul.mubr.bf16.gmra.mxu0 %v863
      %v1007 = vpop.f32.mrf.mxu0
      %v1008 = vadd.f32 %v899, %v1007
      %v1009 = vpop.f32.mrf.mxu0
      %v1010 = vpop.f32.mrf.mxu0
      %v1011 = vadd.f32 %v899, %v1010
      %v1012 = vpop.f32.mrf.mxu0
      %1013 = vmatprep.mubr.bf16.mxu0 0
      %1014 = vmatmul.mubr.bf16.gmra.mxu0 %v864
      %v1015 = vpop.f32.mrf.mxu0
      %v1016 = vadd.f32 %v899, %v1015
      %v1017 = vpop.f32.mrf.mxu0
      %v1018 = vpop.f32.mrf.mxu0
      %v1019 = vadd.f32 %v899, %v1018
      %v1020 = vpop.f32.mrf.mxu0
      %1021 = vmatprep.mubr.bf16.mxu0 0
      %1022 = vmatmul.mubr.bf16.gmra.mxu0 %v865
      %v1023 = vpop.f32.mrf.mxu0
      %v1024 = vadd.f32 %v899, %v1023
      %v1025 = vpop.f32.mrf.mxu0
      %v1026 = vpop.f32.mrf.mxu0
      %v1027 = vadd.f32 %v899, %v1026
      %v1028 = vpop.f32.mrf.mxu0
      %1029 = vmatprep.mubr.bf16.mxu0 0
      %1030 = vmatmul.mubr.bf16.gmra.mxu0 %v866
      %v1031 = vpop.f32.mrf.mxu0
      %v1032 = vadd.f32 %v899, %v1031
      %v1033 = vpop.f32.mrf.mxu0
      %v1034 = vpop.f32.mrf.mxu0
      %v1035 = vadd.f32 %v899, %v1034
      %v1036 = vpop.f32.mrf.mxu0
      %1037 = vmatprep.mubr.bf16.mxu0 0
      %1038 = vmatmul.mubr.bf16.gmra.mxu0 %v867
      %v1039 = vpop.f32.mrf.mxu0
      %v1040 = vadd.f32 %v899, %v1039
      %v1041 = vpop.f32.mrf.mxu0
      %v1042 = vpop.f32.mrf.mxu0
      %v1043 = vadd.f32 %v899, %v1042
      %v1044 = vpop.f32.mrf.mxu0
      %1045 = vmatprep.mubr.bf16.mxu0 0
      %1046 = vmatmul.mubr.bf16.gmra.mxu0 %v868
      %v1047 = vpop.f32.mrf.mxu0
      %v1048 = vadd.f32 %v899, %v1047
      %v1049 = vpop.f32.mrf.mxu0
      %v1050 = vpop.f32.mrf.mxu0
      %v1051 = vadd.f32 %v899, %v1050
      %v1052 = vpop.f32.mrf.mxu0
      %1053 = vmatprep.mubr.bf16.mxu0 0
      %1054 = vmatmul.mubr.bf16.gmra.mxu0 %v869
      %v1055 = vpop.f32.mrf.mxu0
      %v1056 = vadd.f32 %v899, %v1055
      %v1057 = vpop.f32.mrf.mxu0
      %v1058 = vpop.f32.mrf.mxu0
      %v1059 = vadd.f32 %v899, %v1058
      %v1060 = vpop.f32.mrf.mxu0
      %1061 = vmatprep.mubr.bf16.mxu0 0
      %1062 = vmatmul.mubr.bf16.gmra.mxu0 %v870
      %v1063 = vpop.f32.mrf.mxu0
      %v1064 = vadd.f32 %v899, %v1063
      %v1065 = vpop.f32.mrf.mxu0
      %v1066 = vpop.f32.mrf.mxu0
      %v1067 = vadd.f32 %v899, %v1066
      %v1068 = vpop.f32.mrf.mxu0
      %1069 = vmatprep.mubr.bf16.mxu0 0
      %1070 = vmatmul.mubr.bf16.gmra.mxu0 %v871
      %v1071 = vpop.f32.mrf.mxu0
      %v1072 = vadd.f32 %v899, %v1071
      %v1073 = vpop.f32.mrf.mxu0
      %v1074 = vpop.f32.mrf.mxu0
      %v1075 = vadd.f32 %v899, %v1074
      %v1076 = vpop.f32.mrf.mxu0
      %1077 = vmatprep.mubr.bf16.mxu0 0
      %1078 = vmatmul.mubr.bf16.gmra.mxu0 %v872
      %v1079 = vpop.f32.mrf.mxu0
      %v1080 = vadd.f32 %v899, %v1079
      %v1081 = vpop.f32.mrf.mxu0
      %v1082 = vpop.f32.mrf.mxu0
      %v1083 = vadd.f32 %v899, %v1082
      %v1084 = vpop.f32.mrf.mxu0
      %1085 = vmatprep.mubr.bf16.mxu0 0
      %1086 = vmatmul.mubr.bf16.gmra.mxu0 %v873
      %v1087 = vpop.f32.mrf.mxu0
      %v1088 = vadd.f32 %v899, %v1087
      %v1089 = vpop.f32.mrf.mxu0
      %v1090 = vpop.f32.mrf.mxu0
      %v1091 = vadd.f32 %v899, %v1090
      %v1092 = vpop.f32.mrf.mxu0
      %1093 = vmatprep.mubr.bf16.mxu0 0
      %1094 = vmatmul.mubr.bf16.gmra.mxu0 %v874
      %v1095 = vpop.f32.mrf.mxu0
      %v1096 = vadd.f32 %v899, %v1095
      %v1097 = vpop.f32.mrf.mxu0
      %v1098 = vpop.f32.mrf.mxu0
      %v1099 = vadd.f32 %v899, %v1098
      %v1100 = vpop.f32.mrf.mxu0
      %1101 = vmatprep.mubr.bf16.mxu0 0
      %1102 = vmatmul.mubr.bf16.gmra.mxu0 %v875
      %v1103 = vpop.f32.mrf.mxu0
      %v1104 = vadd.f32 %v899, %v1103
      %v1105 = vpop.f32.mrf.mxu0
      %v1106 = vpop.f32.mrf.mxu0
      %v1107 = vadd.f32 %v899, %v1106
      %v1108 = vpop.f32.mrf.mxu0
      %1109 = vdwg.mxu0
      %v1110 = vmax.f32 %v984, 0.0
      %v1111 = vmax.f32 %v987, 0.0
      %v1112 = vmax.f32 %v992, 0.0
      %v1113 = vmax.f32 %v995, 0.0
      %v1114 = vmax.f32 %v1000, 0.0
      %v1115 = vmax.f32 %v1003, 0.0
      %v1116 = vmax.f32 %v1008, 0.0
      %v1117 = vmax.f32 %v1011, 0.0
      %v1118 = vmax.f32 %v1016, 0.0
      %v1119 = vmax.f32 %v1019, 0.0
      %v1120 = vmax.f32 %v1024, 0.0
      %v1121 = vmax.f32 %v1027, 0.0
      %v1122 = vmax.f32 %v1032, 0.0
      %v1123 = vmax.f32 %v1035, 0.0
      %v1124 = vmax.f32 %v1040, 0.0
      %v1125 = vmax.f32 %v1043, 0.0
      %v1126 = vmax.f32 %v1048, 0.0
      %v1127 = vmax.f32 %v1051, 0.0
      %v1128 = vmax.f32 %v1056, 0.0
      %v1129 = vmax.f32 %v1059, 0.0
      %v1130 = vmax.f32 %v1064, 0.0
      %v1131 = vmax.f32 %v1067, 0.0
      %v1132 = vmax.f32 %v1072, 0.0
      %v1133 = vmax.f32 %v1075, 0.0
      %v1134 = vmax.f32 %v1080, 0.0
      %v1135 = vmax.f32 %v1083, 0.0
      %v1136 = vmax.f32 %v1088, 0.0
      %v1137 = vmax.f32 %v1091, 0.0
      %v1138 = vmax.f32 %v1096, 0.0
      %v1139 = vmax.f32 %v1099, 0.0
      %v1140 = vmax.f32 %v1104, 0.0
      %v1141 = vmax.f32 %v1107, 0.0
      %v1142 = vpack.c.bf16 %v1111, %v1110
      %v1143 = vpack.c.bf16 %v1113, %v1112
      %v1144 = vpack.c.bf16 %v1115, %v1114
      %v1145 = vpack.c.bf16 %v1117, %v1116
      %v1146 = vpack.c.bf16 %v1119, %v1118
      %v1147 = vpack.c.bf16 %v1121, %v1120
      %v1148 = vpack.c.bf16 %v1123, %v1122
      %v1149 = vpack.c.bf16 %v1125, %v1124
      %v1150 = vpack.c.bf16 %v1127, %v1126
      %v1151 = vpack.c.bf16 %v1129, %v1128
      %v1152 = vpack.c.bf16 %v1131, %v1130
      %v1153 = vpack.c.bf16 %v1133, %v1132
      %v1154 = vpack.c.bf16 %v1135, %v1134
      %v1155 = vpack.c.bf16 %v1137, %v1136
      %v1156 = vpack.c.bf16 %v1139, %v1138
      %v1157 = vpack.c.bf16 %v1141, %v1140
      %s1158 = scalar_lea.vmem %s2, 128
      %v1159 = vld [vmem:[%s1158] sm:$0xf]
      %v1160 = vld [vmem:[%s1158 + $0x4] sm:$0xf]
      %v1161 = vld [vmem:[%s1158 + $0x8] sm:$0xf]
      %v1162 = vld [vmem:[%s1158 + $0xc] sm:$0xf]
      %v1163 = vld [vmem:[%s1158 + $0x10] sm:$0xf]
      %v1164 = vld [vmem:[%s1158 + $0x14] sm:$0xf]
      %v1165 = vld [vmem:[%s1158 + $0x18] sm:$0xf]
      %v1166 = vld [vmem:[%s1158 + $0x1c] sm:$0xf]
      %v1167 = vld [vmem:[%s1158 + $0x20] sm:$0xf]
      %v1168 = vld [vmem:[%s1158 + $0x24] sm:$0xf]
      %v1169 = vld [vmem:[%s1158 + $0x28] sm:$0xf]
      %v1170 = vld [vmem:[%s1158 + $0x2c] sm:$0xf]
      %v1171 = vld [vmem:[%s1158 + $0x30] sm:$0xf]
      %v1172 = vld [vmem:[%s1158 + $0x34] sm:$0xf]
      %v1173 = vld [vmem:[%s1158 + $0x38] sm:$0xf]
      %v1174 = vld [vmem:[%s1158 + $0x3c] sm:$0xf]
      %s1175 = scalar_lea.vmem %s3, 3
      %v1176 = vld [vmem:[%s1175] sm:$0x1]
      %v1178 = vlaneseq
      %v1179 = vshrl.u32 %v1178, 7
      %v1180 = vsub.s32 0, %v1179
      %v1181 = vrot.slane %v1176, %v1180
      %v1199 = vunpack.c.l.b16 %v1159
      %v1200 = vunpack.c.l.b16 %v1160
      %v1201 = vunpack.c.l.b16 %v1161
      %v1202 = vunpack.c.l.b16 %v1162
      %v1203 = vunpack.c.l.b16 %v1163
      %v1204 = vunpack.c.l.b16 %v1164
      %v1205 = vunpack.c.l.b16 %v1165
      %v1206 = vunpack.c.l.b16 %v1166
      %v1207 = vunpack.c.l.b16 %v1167
      %v1208 = vunpack.c.l.b16 %v1168
      %v1209 = vunpack.c.l.b16 %v1169
      %v1210 = vunpack.c.l.b16 %v1170
      %v1211 = vunpack.c.l.b16 %v1171
      %v1212 = vunpack.c.l.b16 %v1172
      %v1213 = vunpack.c.l.b16 %v1173
      %v1214 = vunpack.c.l.b16 %v1174
      %v1215 = vpack.c.b16 %v1200, %v1199
      %v1216 = vpack.c.b16 %v1202, %v1201
      %v1217 = vpack.c.b16 %v1204, %v1203
      %v1218 = vpack.c.b16 %v1206, %v1205
      %v1219 = vpack.c.b16 %v1208, %v1207
      %v1220 = vpack.c.b16 %v1210, %v1209
      %v1221 = vpack.c.b16 %v1212, %v1211
      %v1222 = vpack.c.b16 %v1214, %v1213
      %1231 = vmatprep.subr.bf16.mxu0 0
      %1232 = vmatpush1.bf16.msra.mxu0 %v1222
      %1233 = vmatprep.subr.bf16.mxu0 0
      %1234 = vmatpush1.bf16.msra.mxu0 %v1221
      %1235 = vmatprep.subr.bf16.mxu0 0
      %1236 = vmatpush1.bf16.msra.mxu0 %v1220
      %1237 = vmatprep.subr.bf16.mxu0 0
      %1238 = vmatpush1.bf16.msra.mxu0 %v1219
      %1239 = vmatprep.subr.bf16.mxu0 0
      %1240 = vmatpush1.bf16.msra.mxu0 %v1218
      %1241 = vmatprep.subr.bf16.mxu0 0
      %1242 = vmatpush1.bf16.msra.mxu0 %v1217
      %1243 = vmatprep.subr.bf16.mxu0 0
      %1244 = vmatpush1.bf16.msra.mxu0 %v1216
      %1245 = vmatprep.subr.bf16.mxu0 0
      %1246 = vmatpush1.bf16.msra.mxu0 %v1215
      %1247 = vmatprep.subr.bf16.mxu0 0
      %1248 = vmatpush2.bf16.msra.mxu0 0
      %1249 = vmatprep.subr.bf16.mxu0 0
      %1250 = vmatpush2.bf16.msra.mxu0 0
      %1251 = vmatprep.subr.bf16.mxu0 0
      %1252 = vmatpush2.bf16.msra.mxu0 0
      %1253 = vmatprep.subr.bf16.mxu0 0
      %1254 = vmatpush2.bf16.msra.mxu0 0
      %1255 = vmatprep.subr.bf16.mxu0 0
      %1256 = vmatpush2.bf16.msra.mxu0 0
      %1257 = vmatprep.subr.bf16.mxu0 0
      %1258 = vmatpush2.bf16.msra.mxu0 0
      %1259 = vmatprep.subr.bf16.mxu0 0
      %1260 = vmatpush2.bf16.msra.mxu0 0
      %1261 = vmatprep.subr.bf16.mxu0 0
      %1262 = vmatpush2.bf16.msra.mxu0 0
      %1263 = vmatprep.mubr.bf16.mxu0 0
      %1264 = vmatmul.mubr.bf16.gmra.mxu0 %v1142
      %v1265 = vpop.f32.mrf.mxu0
      %v1266 = vadd.f32 %v1181, %v1265
      %v1267 = vpop.f32.mrf.mxu0
      %v1268 = vpop.f32.mrf.mxu0
      %v1269 = vadd.f32 %v1181, %v1268
      %v1270 = vpop.f32.mrf.mxu0
      %1271 = vmatprep.mubr.bf16.mxu0 0
      %1272 = vmatmul.mubr.bf16.gmra.mxu0 %v1143
      %v1273 = vpop.f32.mrf.mxu0
      %v1274 = vadd.f32 %v1181, %v1273
      %v1275 = vpop.f32.mrf.mxu0
      %v1276 = vpop.f32.mrf.mxu0
      %v1277 = vadd.f32 %v1181, %v1276
      %v1278 = vpop.f32.mrf.mxu0
      %1279 = vmatprep.mubr.bf16.mxu0 0
      %1280 = vmatmul.mubr.bf16.gmra.mxu0 %v1144
      %v1281 = vpop.f32.mrf.mxu0
      %v1282 = vadd.f32 %v1181, %v1281
      %v1283 = vpop.f32.mrf.mxu0
      %v1284 = vpop.f32.mrf.mxu0
      %v1285 = vadd.f32 %v1181, %v1284
      %v1286 = vpop.f32.mrf.mxu0
      %1287 = vmatprep.mubr.bf16.mxu0 0
      %1288 = vmatmul.mubr.bf16.gmra.mxu0 %v1145
      %v1289 = vpop.f32.mrf.mxu0
      %v1290 = vadd.f32 %v1181, %v1289
      %v1291 = vpop.f32.mrf.mxu0
      %v1292 = vpop.f32.mrf.mxu0
      %v1293 = vadd.f32 %v1181, %v1292
      %v1294 = vpop.f32.mrf.mxu0
      %1295 = vmatprep.mubr.bf16.mxu0 0
      %1296 = vmatmul.mubr.bf16.gmra.mxu0 %v1146
      %v1297 = vpop.f32.mrf.mxu0
      %v1298 = vadd.f32 %v1181, %v1297
      %v1299 = vpop.f32.mrf.mxu0
      %v1300 = vpop.f32.mrf.mxu0
      %v1301 = vadd.f32 %v1181, %v1300
      %v1302 = vpop.f32.mrf.mxu0
      %1303 = vmatprep.mubr.bf16.mxu0 0
      %1304 = vmatmul.mubr.bf16.gmra.mxu0 %v1147
      %v1305 = vpop.f32.mrf.mxu0
      %v1306 = vadd.f32 %v1181, %v1305
      %v1307 = vpop.f32.mrf.mxu0
      %v1308 = vpop.f32.mrf.mxu0
      %v1309 = vadd.f32 %v1181, %v1308
      %v1310 = vpop.f32.mrf.mxu0
      %1311 = vmatprep.mubr.bf16.mxu0 0
      %1312 = vmatmul.mubr.bf16.gmra.mxu0 %v1148
      %v1313 = vpop.f32.mrf.mxu0
      %v1314 = vadd.f32 %v1181, %v1313
      %v1315 = vpop.f32.mrf.mxu0
      %v1316 = vpop.f32.mrf.mxu0
      %v1317 = vadd.f32 %v1181, %v1316
      %v1318 = vpop.f32.mrf.mxu0
      %1319 = vmatprep.mubr.bf16.mxu0 0
      %1320 = vmatmul.mubr.bf16.gmra.mxu0 %v1149
      %v1321 = vpop.f32.mrf.mxu0
      %v1322 = vadd.f32 %v1181, %v1321
      %v1323 = vpop.f32.mrf.mxu0
      %v1324 = vpop.f32.mrf.mxu0
      %v1325 = vadd.f32 %v1181, %v1324
      %v1326 = vpop.f32.mrf.mxu0
      %1327 = vmatprep.mubr.bf16.mxu0 0
      %1328 = vmatmul.mubr.bf16.gmra.mxu0 %v1150
      %v1329 = vpop.f32.mrf.mxu0
      %v1330 = vadd.f32 %v1181, %v1329
      %v1331 = vpop.f32.mrf.mxu0
      %v1332 = vpop.f32.mrf.mxu0
      %v1333 = vadd.f32 %v1181, %v1332
      %v1334 = vpop.f32.mrf.mxu0
      %1335 = vmatprep.mubr.bf16.mxu0 0
      %1336 = vmatmul.mubr.bf16.gmra.mxu0 %v1151
      %v1337 = vpop.f32.mrf.mxu0
      %v1338 = vadd.f32 %v1181, %v1337
      %v1339 = vpop.f32.mrf.mxu0
      %v1340 = vpop.f32.mrf.mxu0
      %v1341 = vadd.f32 %v1181, %v1340
      %v1342 = vpop.f32.mrf.mxu0
      %1343 = vmatprep.mubr.bf16.mxu0 0
      %1344 = vmatmul.mubr.bf16.gmra.mxu0 %v1152
      %v1345 = vpop.f32.mrf.mxu0
      %v1346 = vadd.f32 %v1181, %v1345
      %v1347 = vpop.f32.mrf.mxu0
      %v1348 = vpop.f32.mrf.mxu0
      %v1349 = vadd.f32 %v1181, %v1348
      %v1350 = vpop.f32.mrf.mxu0
      %1351 = vmatprep.mubr.bf16.mxu0 0
      %1352 = vmatmul.mubr.bf16.gmra.mxu0 %v1153
      %v1353 = vpop.f32.mrf.mxu0
      %v1354 = vadd.f32 %v1181, %v1353
      %v1355 = vpop.f32.mrf.mxu0
      %v1356 = vpop.f32.mrf.mxu0
      %v1357 = vadd.f32 %v1181, %v1356
      %v1358 = vpop.f32.mrf.mxu0
      %1359 = vmatprep.mubr.bf16.mxu0 0
      %1360 = vmatmul.mubr.bf16.gmra.mxu0 %v1154
      %v1361 = vpop.f32.mrf.mxu0
      %v1362 = vadd.f32 %v1181, %v1361
      %v1363 = vpop.f32.mrf.mxu0
      %v1364 = vpop.f32.mrf.mxu0
      %v1365 = vadd.f32 %v1181, %v1364
      %v1366 = vpop.f32.mrf.mxu0
      %1367 = vmatprep.mubr.bf16.mxu0 0
      %1368 = vmatmul.mubr.bf16.gmra.mxu0 %v1155
      %v1369 = vpop.f32.mrf.mxu0
      %v1370 = vadd.f32 %v1181, %v1369
      %v1371 = vpop.f32.mrf.mxu0
      %v1372 = vpop.f32.mrf.mxu0
      %v1373 = vadd.f32 %v1181, %v1372
      %v1374 = vpop.f32.mrf.mxu0
      %1375 = vmatprep.mubr.bf16.mxu0 0
      %1376 = vmatmul.mubr.bf16.gmra.mxu0 %v1156
      %v1377 = vpop.f32.mrf.mxu0
      %v1378 = vadd.f32 %v1181, %v1377
      %v1379 = vpop.f32.mrf.mxu0
      %v1380 = vpop.f32.mrf.mxu0
      %v1381 = vadd.f32 %v1181, %v1380
      %v1382 = vpop.f32.mrf.mxu0
      %1383 = vmatprep.mubr.bf16.mxu0 0
      %1384 = vmatmul.mubr.bf16.gmra.mxu0 %v1157
      %v1385 = vpop.f32.mrf.mxu0
      %v1386 = vadd.f32 %v1181, %v1385
      %v1387 = vpop.f32.mrf.mxu0
      %v1388 = vpop.f32.mrf.mxu0
      %v1389 = vadd.f32 %v1181, %v1388
      %v1390 = vpop.f32.mrf.mxu0
      %1391 = vdwg.mxu0
      %v1392 = vmax.f32 %v1266, 0.0
      %v1393 = vmax.f32 %v1269, 0.0
      %v1394 = vmax.f32 %v1274, 0.0
      %v1395 = vmax.f32 %v1277, 0.0
      %v1396 = vmax.f32 %v1282, 0.0
      %v1397 = vmax.f32 %v1285, 0.0
      %v1398 = vmax.f32 %v1290, 0.0
      %v1399 = vmax.f32 %v1293, 0.0
      %v1400 = vmax.f32 %v1298, 0.0
      %v1401 = vmax.f32 %v1301, 0.0
      %v1402 = vmax.f32 %v1306, 0.0
      %v1403 = vmax.f32 %v1309, 0.0
      %v1404 = vmax.f32 %v1314, 0.0
      %v1405 = vmax.f32 %v1317, 0.0
      %v1406 = vmax.f32 %v1322, 0.0
      %v1407 = vmax.f32 %v1325, 0.0
      %v1408 = vmax.f32 %v1330, 0.0
      %v1409 = vmax.f32 %v1333, 0.0
      %v1410 = vmax.f32 %v1338, 0.0
      %v1411 = vmax.f32 %v1341, 0.0
      %v1412 = vmax.f32 %v1346, 0.0
      %v1413 = vmax.f32 %v1349, 0.0
      %v1414 = vmax.f32 %v1354, 0.0
      %v1415 = vmax.f32 %v1357, 0.0
      %v1416 = vmax.f32 %v1362, 0.0
      %v1417 = vmax.f32 %v1365, 0.0
      %v1418 = vmax.f32 %v1370, 0.0
      %v1419 = vmax.f32 %v1373, 0.0
      %v1420 = vmax.f32 %v1378, 0.0
      %v1421 = vmax.f32 %v1381, 0.0
      %v1422 = vmax.f32 %v1386, 0.0
      %v1423 = vmax.f32 %v1389, 0.0
      %v1424 = vpack.c.bf16 %v1393, %v1392
      %v1425 = vpack.c.bf16 %v1395, %v1394
      %v1426 = vpack.c.bf16 %v1397, %v1396
      %v1427 = vpack.c.bf16 %v1399, %v1398
      %v1428 = vpack.c.bf16 %v1401, %v1400
      %v1429 = vpack.c.bf16 %v1403, %v1402
      %v1430 = vpack.c.bf16 %v1405, %v1404
      %v1431 = vpack.c.bf16 %v1407, %v1406
      %v1432 = vpack.c.bf16 %v1409, %v1408
      %v1433 = vpack.c.bf16 %v1411, %v1410
      %v1434 = vpack.c.bf16 %v1413, %v1412
      %v1435 = vpack.c.bf16 %v1415, %v1414
      %v1436 = vpack.c.bf16 %v1417, %v1416
      %v1437 = vpack.c.bf16 %v1419, %v1418
      %v1438 = vpack.c.bf16 %v1421, %v1420
      %v1439 = vpack.c.bf16 %v1423, %v1422
      %s1440 = scalar_lea.vmem %s2, 192
      %v1441 = vld [vmem:[%s1440] sm:$0xf]
      %v1442 = vld [vmem:[%s1440 + $0x4] sm:$0xf]
      %v1443 = vld [vmem:[%s1440 + $0x8] sm:$0xf]
      %v1444 = vld [vmem:[%s1440 + $0xc] sm:$0xf]
      %v1445 = vld [vmem:[%s1440 + $0x10] sm:$0xf]
      %v1446 = vld [vmem:[%s1440 + $0x14] sm:$0xf]
      %v1447 = vld [vmem:[%s1440 + $0x18] sm:$0xf]
      %v1448 = vld [vmem:[%s1440 + $0x1c] sm:$0xf]
      %v1449 = vld [vmem:[%s1440 + $0x20] sm:$0xf]
      %v1450 = vld [vmem:[%s1440 + $0x24] sm:$0xf]
      %v1451 = vld [vmem:[%s1440 + $0x28] sm:$0xf]
      %v1452 = vld [vmem:[%s1440 + $0x2c] sm:$0xf]
      %v1453 = vld [vmem:[%s1440 + $0x30] sm:$0xf]
      %v1454 = vld [vmem:[%s1440 + $0x34] sm:$0xf]
      %v1455 = vld [vmem:[%s1440 + $0x38] sm:$0xf]
      %v1456 = vld [vmem:[%s1440 + $0x3c] sm:$0xf]
      %s1457 = scalar_lea.vmem %s3, 4
      %v1458 = vld [vmem:[%s1457] sm:$0x1]
      %v1460 = vlaneseq
      %v1461 = vshrl.u32 %v1460, 7
      %v1462 = vsub.s32 0, %v1461
      %v1463 = vrot.slane %v1458, %v1462
      %v1481 = vunpack.c.l.b16 %v1441
      %v1482 = vunpack.c.l.b16 %v1442
      %v1483 = vunpack.c.l.b16 %v1443
      %v1484 = vunpack.c.l.b16 %v1444
      %v1485 = vunpack.c.l.b16 %v1445
      %v1486 = vunpack.c.l.b16 %v1446
      %v1487 = vunpack.c.l.b16 %v1447
      %v1488 = vunpack.c.l.b16 %v1448
      %v1489 = vunpack.c.l.b16 %v1449
      %v1490 = vunpack.c.l.b16 %v1450
      %v1491 = vunpack.c.l.b16 %v1451
      %v1492 = vunpack.c.l.b16 %v1452
      %v1493 = vunpack.c.l.b16 %v1453
      %v1494 = vunpack.c.l.b16 %v1454
      %v1495 = vunpack.c.l.b16 %v1455
      %v1496 = vunpack.c.l.b16 %v1456
      %v1497 = vpack.c.b16 %v1482, %v1481
      %v1498 = vpack.c.b16 %v1484, %v1483
      %v1499 = vpack.c.b16 %v1486, %v1485
      %v1500 = vpack.c.b16 %v1488, %v1487
      %v1501 = vpack.c.b16 %v1490, %v1489
      %v1502 = vpack.c.b16 %v1492, %v1491
      %v1503 = vpack.c.b16 %v1494, %v1493
      %v1504 = vpack.c.b16 %v1496, %v1495
      %1513 = vmatprep.subr.bf16.mxu0 0
      %1514 = vmatpush1.bf16.msra.mxu0 %v1504
      %1515 = vmatprep.subr.bf16.mxu0 0
      %1516 = vmatpush1.bf16.msra.mxu0 %v1503
      %1517 = vmatprep.subr.bf16.mxu0 0
      %1518 = vmatpush1.bf16.msra.mxu0 %v1502
      %1519 = vmatprep.subr.bf16.mxu0 0
      %1520 = vmatpush1.bf16.msra.mxu0 %v1501
      %1521 = vmatprep.subr.bf16.mxu0 0
      %1522 = vmatpush1.bf16.msra.mxu0 %v1500
      %1523 = vmatprep.subr.bf16.mxu0 0
      %1524 = vmatpush1.bf16.msra.mxu0 %v1499
      %1525 = vmatprep.subr.bf16.mxu0 0
      %1526 = vmatpush1.bf16.msra.mxu0 %v1498
      %1527 = vmatprep.subr.bf16.mxu0 0
      %1528 = vmatpush1.bf16.msra.mxu0 %v1497
      %1529 = vmatprep.subr.bf16.mxu0 0
      %1530 = vmatpush2.bf16.msra.mxu0 0
      %1531 = vmatprep.subr.bf16.mxu0 0
      %1532 = vmatpush2.bf16.msra.mxu0 0
      %1533 = vmatprep.subr.bf16.mxu0 0
      %1534 = vmatpush2.bf16.msra.mxu0 0
      %1535 = vmatprep.subr.bf16.mxu0 0
      %1536 = vmatpush2.bf16.msra.mxu0 0
      %1537 = vmatprep.subr.bf16.mxu0 0
      %1538 = vmatpush2.bf16.msra.mxu0 0
      %1539 = vmatprep.subr.bf16.mxu0 0
      %1540 = vmatpush2.bf16.msra.mxu0 0
      %1541 = vmatprep.subr.bf16.mxu0 0
      %1542 = vmatpush2.bf16.msra.mxu0 0
      %1543 = vmatprep.subr.bf16.mxu0 0
      %1544 = vmatpush2.bf16.msra.mxu0 0
      %1545 = vmatprep.mubr.bf16.mxu0 0
      %1546 = vmatmul.mubr.bf16.gmra.mxu0 %v1424
      %v1547 = vpop.f32.mrf.mxu0
      %v1548 = vadd.f32 %v1463, %v1547
      %v1549 = vpop.f32.mrf.mxu0
      %v1550 = vpop.f32.mrf.mxu0
      %v1551 = vadd.f32 %v1463, %v1550
      %v1552 = vpop.f32.mrf.mxu0
      %1553 = vmatprep.mubr.bf16.mxu0 0
      %1554 = vmatmul.mubr.bf16.gmra.mxu0 %v1425
      %v1555 = vpop.f32.mrf.mxu0
      %v1556 = vadd.f32 %v1463, %v1555
      %v1557 = vpop.f32.mrf.mxu0
      %v1558 = vpop.f32.mrf.mxu0
      %v1559 = vadd.f32 %v1463, %v1558
      %v1560 = vpop.f32.mrf.mxu0
      %1561 = vmatprep.mubr.bf16.mxu0 0
      %1562 = vmatmul.mubr.bf16.gmra.mxu0 %v1426
      %v1563 = vpop.f32.mrf.mxu0
      %v1564 = vadd.f32 %v1463, %v1563
      %v1565 = vpop.f32.mrf.mxu0
      %v1566 = vpop.f32.mrf.mxu0
      %v1567 = vadd.f32 %v1463, %v1566
      %v1568 = vpop.f32.mrf.mxu0
      %1569 = vmatprep.mubr.bf16.mxu0 0
      %1570 = vmatmul.mubr.bf16.gmra.mxu0 %v1427
      %v1571 = vpop.f32.mrf.mxu0
      %v1572 = vadd.f32 %v1463, %v1571
      %v1573 = vpop.f32.mrf.mxu0
      %v1574 = vpop.f32.mrf.mxu0
      %v1575 = vadd.f32 %v1463, %v1574
      %v1576 = vpop.f32.mrf.mxu0
      %1577 = vmatprep.mubr.bf16.mxu0 0
      %1578 = vmatmul.mubr.bf16.gmra.mxu0 %v1428
      %v1579 = vpop.f32.mrf.mxu0
      %v1580 = vadd.f32 %v1463, %v1579
      %v1581 = vpop.f32.mrf.mxu0
      %v1582 = vpop.f32.mrf.mxu0
      %v1583 = vadd.f32 %v1463, %v1582
      %v1584 = vpop.f32.mrf.mxu0
      %1585 = vmatprep.mubr.bf16.mxu0 0
      %1586 = vmatmul.mubr.bf16.gmra.mxu0 %v1429
      %v1587 = vpop.f32.mrf.mxu0
      %v1588 = vadd.f32 %v1463, %v1587
      %v1589 = vpop.f32.mrf.mxu0
      %v1590 = vpop.f32.mrf.mxu0
      %v1591 = vadd.f32 %v1463, %v1590
      %v1592 = vpop.f32.mrf.mxu0
      %1593 = vmatprep.mubr.bf16.mxu0 0
      %1594 = vmatmul.mubr.bf16.gmra.mxu0 %v1430
      %v1595 = vpop.f32.mrf.mxu0
      %v1596 = vadd.f32 %v1463, %v1595
      %v1597 = vpop.f32.mrf.mxu0
      %v1598 = vpop.f32.mrf.mxu0
      %v1599 = vadd.f32 %v1463, %v1598
      %v1600 = vpop.f32.mrf.mxu0
      %1601 = vmatprep.mubr.bf16.mxu0 0
      %1602 = vmatmul.mubr.bf16.gmra.mxu0 %v1431
      %v1603 = vpop.f32.mrf.mxu0
      %v1604 = vadd.f32 %v1463, %v1603
      %v1605 = vpop.f32.mrf.mxu0
      %v1606 = vpop.f32.mrf.mxu0
      %v1607 = vadd.f32 %v1463, %v1606
      %v1608 = vpop.f32.mrf.mxu0
      %1609 = vmatprep.mubr.bf16.mxu0 0
      %1610 = vmatmul.mubr.bf16.gmra.mxu0 %v1432
      %v1611 = vpop.f32.mrf.mxu0
      %v1612 = vadd.f32 %v1463, %v1611
      %v1613 = vpop.f32.mrf.mxu0
      %v1614 = vpop.f32.mrf.mxu0
      %v1615 = vadd.f32 %v1463, %v1614
      %v1616 = vpop.f32.mrf.mxu0
      %1617 = vmatprep.mubr.bf16.mxu0 0
      %1618 = vmatmul.mubr.bf16.gmra.mxu0 %v1433
      %v1619 = vpop.f32.mrf.mxu0
      %v1620 = vadd.f32 %v1463, %v1619
      %v1621 = vpop.f32.mrf.mxu0
      %v1622 = vpop.f32.mrf.mxu0
      %v1623 = vadd.f32 %v1463, %v1622
      %v1624 = vpop.f32.mrf.mxu0
      %1625 = vmatprep.mubr.bf16.mxu0 0
      %1626 = vmatmul.mubr.bf16.gmra.mxu0 %v1434
      %v1627 = vpop.f32.mrf.mxu0
      %v1628 = vadd.f32 %v1463, %v1627
      %v1629 = vpop.f32.mrf.mxu0
      %v1630 = vpop.f32.mrf.mxu0
      %v1631 = vadd.f32 %v1463, %v1630
      %v1632 = vpop.f32.mrf.mxu0
      %1633 = vmatprep.mubr.bf16.mxu0 0
      %1634 = vmatmul.mubr.bf16.gmra.mxu0 %v1435
      %v1635 = vpop.f32.mrf.mxu0
      %v1636 = vadd.f32 %v1463, %v1635
      %v1637 = vpop.f32.mrf.mxu0
      %v1638 = vpop.f32.mrf.mxu0
      %v1639 = vadd.f32 %v1463, %v1638
      %v1640 = vpop.f32.mrf.mxu0
      %1641 = vmatprep.mubr.bf16.mxu0 0
      %1642 = vmatmul.mubr.bf16.gmra.mxu0 %v1436
      %v1643 = vpop.f32.mrf.mxu0
      %v1644 = vadd.f32 %v1463, %v1643
      %v1645 = vpop.f32.mrf.mxu0
      %v1646 = vpop.f32.mrf.mxu0
      %v1647 = vadd.f32 %v1463, %v1646
      %v1648 = vpop.f32.mrf.mxu0
      %1649 = vmatprep.mubr.bf16.mxu0 0
      %1650 = vmatmul.mubr.bf16.gmra.mxu0 %v1437
      %v1651 = vpop.f32.mrf.mxu0
      %v1652 = vadd.f32 %v1463, %v1651
      %v1653 = vpop.f32.mrf.mxu0
      %v1654 = vpop.f32.mrf.mxu0
      %v1655 = vadd.f32 %v1463, %v1654
      %v1656 = vpop.f32.mrf.mxu0
      %1657 = vmatprep.mubr.bf16.mxu0 0
      %1658 = vmatmul.mubr.bf16.gmra.mxu0 %v1438
      %v1659 = vpop.f32.mrf.mxu0
      %v1660 = vadd.f32 %v1463, %v1659
      %v1661 = vpop.f32.mrf.mxu0
      %v1662 = vpop.f32.mrf.mxu0
      %v1663 = vadd.f32 %v1463, %v1662
      %v1664 = vpop.f32.mrf.mxu0
      %1665 = vmatprep.mubr.bf16.mxu0 0
      %1666 = vmatmul.mubr.bf16.gmra.mxu0 %v1439
      %v1667 = vpop.f32.mrf.mxu0
      %v1668 = vadd.f32 %v1463, %v1667
      %v1669 = vpop.f32.mrf.mxu0
      %v1670 = vpop.f32.mrf.mxu0
      %v1671 = vadd.f32 %v1463, %v1670
      %v1672 = vpop.f32.mrf.mxu0
      %1673 = vdwg.mxu0
      %v1674 = vmax.f32 %v1548, 0.0
      %v1675 = vmax.f32 %v1551, 0.0
      %v1676 = vmax.f32 %v1556, 0.0
      %v1677 = vmax.f32 %v1559, 0.0
      %v1678 = vmax.f32 %v1564, 0.0
      %v1679 = vmax.f32 %v1567, 0.0
      %v1680 = vmax.f32 %v1572, 0.0
      %v1681 = vmax.f32 %v1575, 0.0
      %v1682 = vmax.f32 %v1580, 0.0
      %v1683 = vmax.f32 %v1583, 0.0
      %v1684 = vmax.f32 %v1588, 0.0
      %v1685 = vmax.f32 %v1591, 0.0
      %v1686 = vmax.f32 %v1596, 0.0
      %v1687 = vmax.f32 %v1599, 0.0
      %v1688 = vmax.f32 %v1604, 0.0
      %v1689 = vmax.f32 %v1607, 0.0
      %v1690 = vmax.f32 %v1612, 0.0
      %v1691 = vmax.f32 %v1615, 0.0
      %v1692 = vmax.f32 %v1620, 0.0
      %v1693 = vmax.f32 %v1623, 0.0
      %v1694 = vmax.f32 %v1628, 0.0
      %v1695 = vmax.f32 %v1631, 0.0
      %v1696 = vmax.f32 %v1636, 0.0
      %v1697 = vmax.f32 %v1639, 0.0
      %v1698 = vmax.f32 %v1644, 0.0
      %v1699 = vmax.f32 %v1647, 0.0
      %v1700 = vmax.f32 %v1652, 0.0
      %v1701 = vmax.f32 %v1655, 0.0
      %v1702 = vmax.f32 %v1660, 0.0
      %v1703 = vmax.f32 %v1663, 0.0
      %v1704 = vmax.f32 %v1668, 0.0
      %v1705 = vmax.f32 %v1671, 0.0
      %v1706 = vpack.c.bf16 %v1675, %v1674
      %v1707 = vpack.c.bf16 %v1677, %v1676
      %v1708 = vpack.c.bf16 %v1679, %v1678
      %v1709 = vpack.c.bf16 %v1681, %v1680
      %v1710 = vpack.c.bf16 %v1683, %v1682
      %v1711 = vpack.c.bf16 %v1685, %v1684
      %v1712 = vpack.c.bf16 %v1687, %v1686
      %v1713 = vpack.c.bf16 %v1689, %v1688
      %v1714 = vpack.c.bf16 %v1691, %v1690
      %v1715 = vpack.c.bf16 %v1693, %v1692
      %v1716 = vpack.c.bf16 %v1695, %v1694
      %v1717 = vpack.c.bf16 %v1697, %v1696
      %v1718 = vpack.c.bf16 %v1699, %v1698
      %v1719 = vpack.c.bf16 %v1701, %v1700
      %v1720 = vpack.c.bf16 %v1703, %v1702
      %v1721 = vpack.c.bf16 %v1705, %v1704
      %s1722 = scalar_lea.vmem %s2, 256
      %v1723 = vld [vmem:[%s1722] sm:$0xf]
      %v1724 = vld [vmem:[%s1722 + $0x4] sm:$0xf]
      %v1725 = vld [vmem:[%s1722 + $0x8] sm:$0xf]
      %v1726 = vld [vmem:[%s1722 + $0xc] sm:$0xf]
      %v1727 = vld [vmem:[%s1722 + $0x10] sm:$0xf]
      %v1728 = vld [vmem:[%s1722 + $0x14] sm:$0xf]
      %v1729 = vld [vmem:[%s1722 + $0x18] sm:$0xf]
      %v1730 = vld [vmem:[%s1722 + $0x1c] sm:$0xf]
      %v1731 = vld [vmem:[%s1722 + $0x20] sm:$0xf]
      %v1732 = vld [vmem:[%s1722 + $0x24] sm:$0xf]
      %v1733 = vld [vmem:[%s1722 + $0x28] sm:$0xf]
      %v1734 = vld [vmem:[%s1722 + $0x2c] sm:$0xf]
      %v1735 = vld [vmem:[%s1722 + $0x30] sm:$0xf]
      %v1736 = vld [vmem:[%s1722 + $0x34] sm:$0xf]
      %v1737 = vld [vmem:[%s1722 + $0x38] sm:$0xf]
      %v1738 = vld [vmem:[%s1722 + $0x3c] sm:$0xf]
      %s1739 = scalar_lea.vmem %s3, 5
      %v1740 = vld [vmem:[%s1739] sm:$0x1]
      %v1742 = vlaneseq
      %v1743 = vshrl.u32 %v1742, 7
      %v1744 = vsub.s32 0, %v1743
      %v1745 = vrot.slane %v1740, %v1744
      %v1763 = vunpack.c.l.b16 %v1723
      %v1764 = vunpack.c.l.b16 %v1724
      %v1765 = vunpack.c.l.b16 %v1725
      %v1766 = vunpack.c.l.b16 %v1726
      %v1767 = vunpack.c.l.b16 %v1727
      %v1768 = vunpack.c.l.b16 %v1728
      %v1769 = vunpack.c.l.b16 %v1729
      %v1770 = vunpack.c.l.b16 %v1730
      %v1771 = vunpack.c.l.b16 %v1731
      %v1772 = vunpack.c.l.b16 %v1732
      %v1773 = vunpack.c.l.b16 %v1733
      %v1774 = vunpack.c.l.b16 %v1734
      %v1775 = vunpack.c.l.b16 %v1735
      %v1776 = vunpack.c.l.b16 %v1736
      %v1777 = vunpack.c.l.b16 %v1737
      %v1778 = vunpack.c.l.b16 %v1738
      %v1779 = vpack.c.b16 %v1764, %v1763
      %v1780 = vpack.c.b16 %v1766, %v1765
      %v1781 = vpack.c.b16 %v1768, %v1767
      %v1782 = vpack.c.b16 %v1770, %v1769
      %v1783 = vpack.c.b16 %v1772, %v1771
      %v1784 = vpack.c.b16 %v1774, %v1773
      %v1785 = vpack.c.b16 %v1776, %v1775
      %v1786 = vpack.c.b16 %v1778, %v1777
      %1795 = vmatprep.subr.bf16.mxu0 0
      %1796 = vmatpush1.bf16.msra.mxu0 %v1786
      %1797 = vmatprep.subr.bf16.mxu0 0
      %1798 = vmatpush1.bf16.msra.mxu0 %v1785
      %1799 = vmatprep.subr.bf16.mxu0 0
      %1800 = vmatpush1.bf16.msra.mxu0 %v1784
      %1801 = vmatprep.subr.bf16.mxu0 0
      %1802 = vmatpush1.bf16.msra.mxu0 %v1783
      %1803 = vmatprep.subr.bf16.mxu0 0
      %1804 = vmatpush1.bf16.msra.mxu0 %v1782
      %1805 = vmatprep.subr.bf16.mxu0 0
      %1806 = vmatpush1.bf16.msra.mxu0 %v1781
      %1807 = vmatprep.subr.bf16.mxu0 0
      %1808 = vmatpush1.bf16.msra.mxu0 %v1780
      %1809 = vmatprep.subr.bf16.mxu0 0
      %1810 = vmatpush1.bf16.msra.mxu0 %v1779
      %1811 = vmatprep.subr.bf16.mxu0 0
      %1812 = vmatpush2.bf16.msra.mxu0 0
      %1813 = vmatprep.subr.bf16.mxu0 0
      %1814 = vmatpush2.bf16.msra.mxu0 0
      %1815 = vmatprep.subr.bf16.mxu0 0
      %1816 = vmatpush2.bf16.msra.mxu0 0
      %1817 = vmatprep.subr.bf16.mxu0 0
      %1818 = vmatpush2.bf16.msra.mxu0 0
      %1819 = vmatprep.subr.bf16.mxu0 0
      %1820 = vmatpush2.bf16.msra.mxu0 0
      %1821 = vmatprep.subr.bf16.mxu0 0
      %1822 = vmatpush2.bf16.msra.mxu0 0
      %1823 = vmatprep.subr.bf16.mxu0 0
      %1824 = vmatpush2.bf16.msra.mxu0 0
      %1825 = vmatprep.subr.bf16.mxu0 0
      %1826 = vmatpush2.bf16.msra.mxu0 0
      %1827 = vmatprep.mubr.bf16.mxu0 0
      %1828 = vmatmul.mubr.bf16.gmra.mxu0 %v1706
      %v1829 = vpop.f32.mrf.mxu0
      %v1830 = vadd.f32 %v1745, %v1829
      %v1831 = vpop.f32.mrf.mxu0
      %v1832 = vpop.f32.mrf.mxu0
      %v1833 = vadd.f32 %v1745, %v1832
      %v1834 = vpop.f32.mrf.mxu0
      %1835 = vmatprep.mubr.bf16.mxu0 0
      %1836 = vmatmul.mubr.bf16.gmra.mxu0 %v1707
      %v1837 = vpop.f32.mrf.mxu0
      %v1838 = vadd.f32 %v1745, %v1837
      %v1839 = vpop.f32.mrf.mxu0
      %v1840 = vpop.f32.mrf.mxu0
      %v1841 = vadd.f32 %v1745, %v1840
      %v1842 = vpop.f32.mrf.mxu0
      %1843 = vmatprep.mubr.bf16.mxu0 0
      %1844 = vmatmul.mubr.bf16.gmra.mxu0 %v1708
      %v1845 = vpop.f32.mrf.mxu0
      %v1846 = vadd.f32 %v1745, %v1845
      %v1847 = vpop.f32.mrf.mxu0
      %v1848 = vpop.f32.mrf.mxu0
      %v1849 = vadd.f32 %v1745, %v1848
      %v1850 = vpop.f32.mrf.mxu0
      %1851 = vmatprep.mubr.bf16.mxu0 0
      %1852 = vmatmul.mubr.bf16.gmra.mxu0 %v1709
      %v1853 = vpop.f32.mrf.mxu0
      %v1854 = vadd.f32 %v1745, %v1853
      %v1855 = vpop.f32.mrf.mxu0
      %v1856 = vpop.f32.mrf.mxu0
      %v1857 = vadd.f32 %v1745, %v1856
      %v1858 = vpop.f32.mrf.mxu0
      %1859 = vmatprep.mubr.bf16.mxu0 0
      %1860 = vmatmul.mubr.bf16.gmra.mxu0 %v1710
      %v1861 = vpop.f32.mrf.mxu0
      %v1862 = vadd.f32 %v1745, %v1861
      %v1863 = vpop.f32.mrf.mxu0
      %v1864 = vpop.f32.mrf.mxu0
      %v1865 = vadd.f32 %v1745, %v1864
      %v1866 = vpop.f32.mrf.mxu0
      %1867 = vmatprep.mubr.bf16.mxu0 0
      %1868 = vmatmul.mubr.bf16.gmra.mxu0 %v1711
      %v1869 = vpop.f32.mrf.mxu0
      %v1870 = vadd.f32 %v1745, %v1869
      %v1871 = vpop.f32.mrf.mxu0
      %v1872 = vpop.f32.mrf.mxu0
      %v1873 = vadd.f32 %v1745, %v1872
      %v1874 = vpop.f32.mrf.mxu0
      %1875 = vmatprep.mubr.bf16.mxu0 0
      %1876 = vmatmul.mubr.bf16.gmra.mxu0 %v1712
      %v1877 = vpop.f32.mrf.mxu0
      %v1878 = vadd.f32 %v1745, %v1877
      %v1879 = vpop.f32.mrf.mxu0
      %v1880 = vpop.f32.mrf.mxu0
      %v1881 = vadd.f32 %v1745, %v1880
      %v1882 = vpop.f32.mrf.mxu0
      %1883 = vmatprep.mubr.bf16.mxu0 0
      %1884 = vmatmul.mubr.bf16.gmra.mxu0 %v1713
      %v1885 = vpop.f32.mrf.mxu0
      %v1886 = vadd.f32 %v1745, %v1885
      %v1887 = vpop.f32.mrf.mxu0
      %v1888 = vpop.f32.mrf.mxu0
      %v1889 = vadd.f32 %v1745, %v1888
      %v1890 = vpop.f32.mrf.mxu0
      %1891 = vmatprep.mubr.bf16.mxu0 0
      %1892 = vmatmul.mubr.bf16.gmra.mxu0 %v1714
      %v1893 = vpop.f32.mrf.mxu0
      %v1894 = vadd.f32 %v1745, %v1893
      %v1895 = vpop.f32.mrf.mxu0
      %v1896 = vpop.f32.mrf.mxu0
      %v1897 = vadd.f32 %v1745, %v1896
      %v1898 = vpop.f32.mrf.mxu0
      %1899 = vmatprep.mubr.bf16.mxu0 0
      %1900 = vmatmul.mubr.bf16.gmra.mxu0 %v1715
      %v1901 = vpop.f32.mrf.mxu0
      %v1902 = vadd.f32 %v1745, %v1901
      %v1903 = vpop.f32.mrf.mxu0
      %v1904 = vpop.f32.mrf.mxu0
      %v1905 = vadd.f32 %v1745, %v1904
      %v1906 = vpop.f32.mrf.mxu0
      %1907 = vmatprep.mubr.bf16.mxu0 0
      %1908 = vmatmul.mubr.bf16.gmra.mxu0 %v1716
      %v1909 = vpop.f32.mrf.mxu0
      %v1910 = vadd.f32 %v1745, %v1909
      %v1911 = vpop.f32.mrf.mxu0
      %v1912 = vpop.f32.mrf.mxu0
      %v1913 = vadd.f32 %v1745, %v1912
      %v1914 = vpop.f32.mrf.mxu0
      %1915 = vmatprep.mubr.bf16.mxu0 0
      %1916 = vmatmul.mubr.bf16.gmra.mxu0 %v1717
      %v1917 = vpop.f32.mrf.mxu0
      %v1918 = vadd.f32 %v1745, %v1917
      %v1919 = vpop.f32.mrf.mxu0
      %v1920 = vpop.f32.mrf.mxu0
      %v1921 = vadd.f32 %v1745, %v1920
      %v1922 = vpop.f32.mrf.mxu0
      %1923 = vmatprep.mubr.bf16.mxu0 0
      %1924 = vmatmul.mubr.bf16.gmra.mxu0 %v1718
      %v1925 = vpop.f32.mrf.mxu0
      %v1926 = vadd.f32 %v1745, %v1925
      %v1927 = vpop.f32.mrf.mxu0
      %v1928 = vpop.f32.mrf.mxu0
      %v1929 = vadd.f32 %v1745, %v1928
      %v1930 = vpop.f32.mrf.mxu0
      %1931 = vmatprep.mubr.bf16.mxu0 0
      %1932 = vmatmul.mubr.bf16.gmra.mxu0 %v1719
      %v1933 = vpop.f32.mrf.mxu0
      %v1934 = vadd.f32 %v1745, %v1933
      %v1935 = vpop.f32.mrf.mxu0
      %v1936 = vpop.f32.mrf.mxu0
      %v1937 = vadd.f32 %v1745, %v1936
      %v1938 = vpop.f32.mrf.mxu0
      %1939 = vmatprep.mubr.bf16.mxu0 0
      %1940 = vmatmul.mubr.bf16.gmra.mxu0 %v1720
      %v1941 = vpop.f32.mrf.mxu0
      %v1942 = vadd.f32 %v1745, %v1941
      %v1943 = vpop.f32.mrf.mxu0
      %v1944 = vpop.f32.mrf.mxu0
      %v1945 = vadd.f32 %v1745, %v1944
      %v1946 = vpop.f32.mrf.mxu0
      %1947 = vmatprep.mubr.bf16.mxu0 0
      %1948 = vmatmul.mubr.bf16.gmra.mxu0 %v1721
      %v1949 = vpop.f32.mrf.mxu0
      %v1950 = vadd.f32 %v1745, %v1949
      %v1951 = vpop.f32.mrf.mxu0
      %v1952 = vpop.f32.mrf.mxu0
      %v1953 = vadd.f32 %v1745, %v1952
      %v1954 = vpop.f32.mrf.mxu0
      %1955 = vdwg.mxu0
      %1956 = vst [vmem:[%s199] sm:$0xff] %v1830
      %1957 = vst [vmem:[%s199 + $0x8] sm:$0xff] %v1833
      %1958 = vst [vmem:[%s199 + $0x10] sm:$0xff] %v1838
      %1959 = vst [vmem:[%s199 + $0x18] sm:$0xff] %v1841
      %1960 = vst [vmem:[%s199 + $0x20] sm:$0xff] %v1846
      %1961 = vst [vmem:[%s199 + $0x28] sm:$0xff] %v1849
      %1962 = vst [vmem:[%s199 + $0x30] sm:$0xff] %v1854
      %1963 = vst [vmem:[%s199 + $0x38] sm:$0xff] %v1857
      %1964 = vst [vmem:[%s199 + $0x40] sm:$0xff] %v1862
      %1965 = vst [vmem:[%s199 + $0x48] sm:$0xff] %v1865
      %1966 = vst [vmem:[%s199 + $0x50] sm:$0xff] %v1870
      %1967 = vst [vmem:[%s199 + $0x58] sm:$0xff] %v1873
      %1968 = vst [vmem:[%s199 + $0x60] sm:$0xff] %v1878
      %1969 = vst [vmem:[%s199 + $0x68] sm:$0xff] %v1881
      %1970 = vst [vmem:[%s199 + $0x70] sm:$0xff] %v1886
      %1971 = vst [vmem:[%s199 + $0x78] sm:$0xff] %v1889
      %1972 = vst [vmem:[%s199 + $0x80] sm:$0xff] %v1894
      %1973 = vst [vmem:[%s199 + $0x88] sm:$0xff] %v1897
      %1974 = vst [vmem:[%s199 + $0x90] sm:$0xff] %v1902
      %1975 = vst [vmem:[%s199 + $0x98] sm:$0xff] %v1905
      %1976 = vst [vmem:[%s199 + $0xa0] sm:$0xff] %v1910
      %1977 = vst [vmem:[%s199 + $0xa8] sm:$0xff] %v1913
      %1978 = vst [vmem:[%s199 + $0xb0] sm:$0xff] %v1918
      %1979 = vst [vmem:[%s199 + $0xb8] sm:$0xff] %v1921
      %1980 = vst [vmem:[%s199 + $0xc0] sm:$0xff] %v1926
      %1981 = vst [vmem:[%s199 + $0xc8] sm:$0xff] %v1929
      %1982 = vst [vmem:[%s199 + $0xd0] sm:$0xff] %v1934
      %1983 = vst [vmem:[%s199 + $0xd8] sm:$0xff] %v1937
      %1984 = vst [vmem:[%s199 + $0xe0] sm:$0xff] %v1942
      %1985 = vst [vmem:[%s199 + $0xe8] sm:$0xff] %v1945
      %1986 = vst [vmem:[%s199 + $0xf0] sm:$0xff] %v1950
      %1987 = vst [vmem:[%s199 + $0xf8] sm:$0xff] %v1953
      %s1988 = smul.u32 32, %s15
      %p1989 = scmp.lt.s32.totalorder %s1988, 63
      %s1990 = scalar_select %p1989, %s1988, 63
      %s1991 = smul.addr %s1990, 8
      %s1992 = scalar_lea.vmem %s4, %s1991
      // Predicated region
      $region37: #{batch_net_5_2_forward.1} parent=35 // pred_check
        %p1993 = pneg %p122
      $region38: #{batch_net_5_2_forward.1} parent=35 // pred_check_branch
        %1995 = sbr.rel (%p1993) target = $region40
      $region39: #{batch_net_5_2_forward.1} parent=35 // pred_region
        %s1996 = smul.u32 32, %s15
      $region40: #{batch_net_5_2_forward.1} parent=35 // pred_fallthru
        _
    $region36: #{batch_net_5_2_forward.1} parent=5 // pred_fallthru
      _
    %p1997 = scmp.le.s32.totalorder 2, %s10
    // Predicated region
    $region41: #{batch_net_5_2_forward.1} parent=5 // pred_check
      %p1998 = pneg %p1997
    $region42: #{batch_net_5_2_forward.1} parent=5 // pred_check_branch
      %2000 = sbr.rel (%p1998) target = $region44
    $region43: #{batch_net_5_2_forward.1} parent=5 // pred_region
      %s2001 = ssub.s32 %s10, 2
      // Predicated region
      $region45: #{batch_net_5_2_forward.1} parent=43 // pred_check
        %p2002 = pneg %p128
      $region46: #{batch_net_5_2_forward.1} parent=43 // pred_check_branch
        %2004 = sbr.rel (%p2002) target = $region48
      $region47: #{batch_net_5_2_forward.1} parent=43 // pred_region
        %s2005 = smul.u32 32, %s16
        %p2006 = scmp.lt.s32.totalorder %s2005, 63
        %s2007 = scalar_select %p2006, %s2005, 63
        %s2008 = smul.addr %s2007, 8
        %s2009 = scalar_lea.vmem %s4, %s2008
      $region48: #{batch_net_5_2_forward.1} parent=43 // pred_fallthru
        _
    $region44: #{batch_net_5_2_forward.1} parent=5 // pred_fallthru
      _
  $region6: #{batch_net_5_2_forward.1} parent=0 // loop_footer
    %s14 = sadd.s32 1, %s10
  $region7: #{batch_net_5_2_forward.1} parent=0 // loop_footer_branch
    %9 = sbr.rel target = $region3
  $region8: #{batch_net_5_2_forward.1} parent=0 // loop_exit
    _

</llo_original>
